<compile_context>
chip_gen: v7x
topology: tpu7x:2x2x1
jax: 0.10.0
libtpu: 0.0.40
codegen_flags: <defaults>
</compile_context>

<pallas_src>
import math

import jax
import jax.numpy as jnp
from jax.experimental import pallas as pl
from jax.experimental.pallas import tpu as pltpu


def _round_up(x, m):
    return ((x + m - 1) // m) * m


def _vmem_capacity_bytes():
    try:
        return int(pltpu.get_tpu_info().vmem_capacity_bytes)
    except Exception:
        return 64 << 20  # conservative default (v7x per-TensorCore)


def _make_mlp_kernel(ch1, n_chunks):
    """ch1: H1 chunk width (multiple of 128, divides H1p); n_chunks = H1p // ch1."""

    def kernel(x_ref, w1_ref, b1_ref, w2_ref, b2_ref, w3_ref, b3_ref, o_ref):
        x = x_ref[...]                       # (TB, Dp) bf16 batch tile
        tb = x.shape[0]
        h2p = w2_ref.shape[1]

        # Fused layer1 -> layer2 over H1 chunks: h2 += relu(x @ W1[:, c] + b1[c]) @ W2[c, :]
        # Keeps live activations to a few vregs instead of a (TB, H1p) f32 slab.
        def chunk_update(c, acc):
            start = c * ch1
            if not isinstance(start, int):
                start = pl.multiple_of(start, 128)
            w1c = w1_ref[:, pl.ds(start, ch1)]          # (Dp, ch1) bf16
            b1c = b1_ref[:, pl.ds(start, ch1)]          # (1, ch1)  f32
            h1c = jnp.dot(x, w1c, preferred_element_type=jnp.float32) + b1c
            h1c = jnp.maximum(h1c, 0.0)
            # TODO(synk): training-mode Dropout(0.2) would use pltpu.prng_seed /
            # pltpu.prng_random_bits here; inference mode == identity.
            w2c = w2_ref[pl.ds(start, ch1), :]          # (ch1, H2p) bf16
            return acc + jnp.dot(h1c.astype(jnp.bfloat16), w2c,
                                 preferred_element_type=jnp.float32)

        acc0 = jnp.zeros((tb, h2p), jnp.float32)
        if n_chunks == 1:
            h2 = chunk_update(0, acc0)
        else:
            h2 = jax.lax.fori_loop(0, n_chunks, chunk_update, acc0,
                                   unroll=min(n_chunks, 8))

        h2 = jnp.maximum(h2 + b2_ref[...], 0.0)

        # Output layer (out_features == 1): VPU multiply + XLU lane-reduction.
        logits = jnp.sum(h2 * w3_ref[...], axis=-1, keepdims=True) + b3_ref[0]

        # Sigmoid (EUP); (TB, 1) store is tiny (B*4 bytes) -> off the critical path.
        o_ref[...] = jax.nn.sigmoid(logits)

    return kernel


def prepare_params(params, lane=128):
    """Zero-pad D/H1/H2 to multiples of `lane` (exact result preserved: padded
    rows/cols are zero), transpose w3 to a (1, H2p) row, cast matmul weights to
    bf16, keep biases f32, b3 as an SMEM-friendly (1,) scalar array."""
    # Note: lane=256 leaves less of the v6e/v7x 2x256^2 MXU idle when the extra
    # zero-FLOPs are small; 128 is always correct and fully serves v5e.
    w1, b1, w2, b2, w3, b3 = params            # (in, out) layout, biases (1, out)
    D, H1 = w1.shape
    H2 = w2.shape[1]
    Dp = _round_up(D, lane)
    H1p = _round_up(H1, lane)
    H2p = _round_up(H2, lane)

    w1p = jnp.zeros((Dp, H1p), jnp.float32).at[:D, :H1].set(w1)
    b1p = jnp.zeros((1, H1p), jnp.float32).at[:, :H1].set(b1.reshape(1, -1))
    w2p = jnp.zeros((H1p, H2p), jnp.float32).at[:H1, :H2].set(w2)
    b2p = jnp.zeros((1, H2p), jnp.float32).at[:, :H2].set(b2.reshape(1, -1))
    w3p = jnp.zeros((1, H2p), jnp.float32).at[:, :H2].set(w3.reshape(1, -1))
    b3p = jnp.asarray(b3, jnp.float32).reshape(1)

    return (w1p.astype(jnp.bfloat16), b1p,
            w2p.astype(jnp.bfloat16), b2p,
            w3p, b3p)


def neural_network_mask_forward(x, prepared):
    """x: (B, 2*N*N) float32 -> (B,) float32, same semantics as the PyTorch module
    in eval mode.  `prepared` comes from prepare_params(init_params(...))."""
    w1, b1, w2, b2, w3, b3 = prepared
    B, D = x.shape
    Dp, H1p = w1.shape
    H2p = w2.shape[1]

    # H1 chunk width for the fused layer1->layer2 accumulation.
    CH1 = 128
    for c in (512, 256, 128):
        if H1p % c == 0:
            CH1 = c
            break
    n_chunks = H1p // CH1

    cap = _vmem_capacity_bytes()
    weight_bytes = (w1.size * 2 + w2.size * 2
                    + (b1.size + b2.size + w3.size) * 4)

    # TODO(synk): when weight_bytes exceeds ~24-32 MiB (large N on v7x's 64 MiB VMEM),
    # W1/W2 should be streamed from HBM (memory_space=pl.ANY + pltpu.emit_pipeline
    # over H1 slabs) instead of held VMEM-resident.

    # Batch tile: derive from VMEM left after single-buffered resident weights;
    # double-buffered x rows + live f32 activations per batch row.
    per_row_bytes = 2 * Dp * 2 + (CH1 + H2p + 4) * 4 + 2 * 4
    avail = int(cap * 0.7) - weight_bytes - (8 << 20)
    tb_cap = 128
    if avail > 0:
        tb_cap = max(128, (avail // per_row_bytes) // 128 * 128)

    if B >= 256:
        # Keep >= 2 batch tiles so dimension_semantics=("parallel",) can shard
        # the grid across both TensorCores (v7x megacore).
        tb_target = _round_up((B + 1) // 2, 128)
    else:
        tb_target = _round_up(B, 128)
    TB = int(max(128, min(tb_target, 1024, tb_cap)))
    B_pad = _round_up(B, TB)
    n_tiles = B_pad // TB

    xb = x.astype(jnp.bfloat16)
    if B_pad != B or Dp != D:
        xb = jnp.pad(xb, ((0, B_pad - B), (0, Dp - D)))

    # VMEM budget: single-buffered weights + double-buffered x/out tiles +
    # live activations + headroom, clamped to ~80% of physical VMEM capacity.
    vmem_limit = (weight_bytes
                  + 2 * (TB * Dp * 2 + TB * 4)
                  + TB * (CH1 + H2p + 2) * 4 + TB * Dp * 2
                  + (8 << 20))
    vmem_limit = int(min(max(vmem_limit, 32 << 20), int(cap * 0.8)))

    flops = 2 * B_pad * (Dp * H1p + H1p * H2p + H2p)
    bytes_accessed = xb.size * 2 + weight_bytes + B_pad * 4

    kernel = _make_mlp_kernel(CH1, n_chunks)

    def build(use_buffered):
        def resident(shape):
            # Constant index_map -> block never changes; single-buffer it so the
            # weight footprint is not doubled by the default 2-deep pipeline.
            if use_buffered:
                return pl.BlockSpec(shape, lambda i: (0, 0),
                                    pipeline_mode=pl.Buffered(1))
            return pl.BlockSpec(shape, lambda i: (0, 0))

        return pl.pallas_call(
            kernel,
            out_shape=jax.ShapeDtypeStruct((B_pad, 1), jnp.float32),
            grid=(n_tiles,),
            in_specs=[
                pl.BlockSpec((TB, Dp), lambda i: (i, 0)),        # x: tiled over batch
                resident((Dp, H1p)),                             # W1 (VMEM-resident)
                resident((1, H1p)),                              # b1
                resident((H1p, H2p)),                            # W2
                resident((1, H2p)),                              # b2
                resident((1, H2p)),                              # W3 (as a row)
                pl.BlockSpec(memory_space=pltpu.MemorySpace.SMEM),  # b3 scalar
            ],
            out_specs=pl.BlockSpec((TB, 1), lambda i: (i, 0)),
            compiler_params=pltpu.CompilerParams(
                dimension_semantics=("parallel",),
                vmem_limit_bytes=vmem_limit,
            ),
            cost_estimate=pl.CostEstimate(
                flops=int(flops),
                transcendentals=int(B_pad),
                bytes_accessed=int(bytes_accessed),
            ),
        )

    try:
        out = build(True)(xb, w1, b1, w2, b2, w3, b3)
    except Exception:
        # Fallback if this jax build rejects Buffered(1) single-buffering.
        out = build(False)(xb, w1, b1, w2, b2, w3, b3)

    return out[:B, 0]                                            # .flatten(), unpadded


def init_params(N, key):
    """Deterministic init mirroring nn.Linear default (U[-1/sqrt(fan_in), 1/sqrt(fan_in)]).
    Weights stored as (in_features, out_features), biases as (1, out_features)."""
    vector_len = 2 * N * N
    h1 = vector_len // 2
    h2 = int(vector_len / 10)

    keys = jax.random.split(key, 6)

    def lin(kw, kb, fan_in, fan_out):
        bound = 1.0 / math.sqrt(fan_in)
        w = jax.random.uniform(kw, (fan_in, fan_out), jnp.float32, -bound, bound)
        b = jax.random.uniform(kb, (1, fan_out), jnp.float32, -bound, bound)
        return w, b

    w1, b1 = lin(keys[0], keys[1], vector_len, h1)
    w2, b2 = lin(keys[2], keys[3], h1, h2)
    w3, b3 = lin(keys[4], keys[5], h2, 1)
    return (w1, b1, w2, b2, w3, b3)


def reference_forward_bf16(x, params):
    """Pure-JAX reference mirroring the kernel numerics (bf16 matmul inputs, f32 accum)."""
    w1, b1, w2, b2, w3, b3 = params
    xb = x.astype(jnp.bfloat16)
    h1 = jnp.dot(xb, w1.astype(jnp.bfloat16), preferred_element_type=jnp.float32) + b1
    h1 = jnp.maximum(h1, 0.0)
    h2 = jnp.dot(h1.astype(jnp.bfloat16), w2.astype(jnp.bfloat16),
                 preferred_element_type=jnp.float32) + b2
    h2 = jnp.maximum(h2, 0.0)
    logits = jnp.sum(h2 * w3.reshape(1, -1), axis=-1, keepdims=True) + b3.reshape(1, 1)
    return jax.nn.sigmoid(logits).reshape(-1)


def reference_forward_f32(x, params):
    """Pure-f32 reference matching the PyTorch module exactly (eval mode)."""
    w1, b1, w2, b2, w3, b3 = params
    h1 = jnp.maximum(x @ w1 + b1, 0.0)
    h2 = jnp.maximum(h1 @ w2 + b2, 0.0)
    return jax.nn.sigmoid(h2 @ w3 + b3).reshape(-1)


if __name__ == "__main__":
    N = 4                    # -> vector_len = 2*N*N = 32, hidden1=16, hidden2=3
    batch = 8

    key = jax.random.PRNGKey(0)
    kx, kp = jax.random.split(key)

    raw_params = init_params(N, kp)
    x = jax.random.normal(kx, (batch, 2 * N * N), jnp.float32)

    prepared = prepare_params(raw_params)
    out = neural_network_mask_forward(x, prepared)
    out = jax.block_until_ready(out)

    assert out.shape == (batch,)

    ref_bf16 = reference_forward_bf16(x, raw_params)
    ref_f32 = reference_forward_f32(x, raw_params)
    assert jnp.allclose(out, ref_bf16, atol=2e-3, rtol=2e-3), (out, ref_bf16)
    assert jnp.allclose(out, ref_f32, atol=3e-2, rtol=3e-2), (out, ref_f32)

    print("KERNEL_OK")
</pallas_src>

<mosaic_0001>
module attributes {stable_mosaic.version = 11 : i64} {
  func.func @kernel(%arg0: i32, %arg1: memref<128x128xbf16, #tpu.memory_space<vmem>>, %arg2: memref<128x128xbf16, #tpu.memory_space<vmem>>, %arg3: memref<1x128xf32, #tpu.memory_space<vmem>>, %arg4: memref<128x128xbf16, #tpu.memory_space<vmem>>, %arg5: memref<1x128xf32, #tpu.memory_space<vmem>>, %arg6: memref<1x128xf32, #tpu.memory_space<vmem>>, %arg7: memref<1xf32, #tpu.memory_space<smem>>, %arg8: memref<128x1xf32, #tpu.memory_space<vmem>>) attributes {dimension_semantics = [#tpu.dimension_semantics<parallel>], iteration_bounds = array<i64: 1>, scalar_prefetch = 0 : i64, scratch_operands = 0 : i64, tpu.core_type = #tpu.core_type<tc>, window_params = [{transform_indices = @transform_0, window_bounds = array<i64: 128, 128>}, {pipeline_mode = #tpu.pipeline_mode<synchronous>, transform_indices = @transform_1, window_bounds = array<i64: 128, 128>}, {pipeline_mode = #tpu.pipeline_mode<synchronous>, transform_indices = @transform_2, window_bounds = array<i64: 1, 128>}, {pipeline_mode = #tpu.pipeline_mode<synchronous>, transform_indices = @transform_3, window_bounds = array<i64: 128, 128>}, {pipeline_mode = #tpu.pipeline_mode<synchronous>, transform_indices = @transform_4, window_bounds = array<i64: 1, 128>}, {pipeline_mode = #tpu.pipeline_mode<synchronous>, transform_indices = @transform_5, window_bounds = array<i64: 1, 128>}, {transform_indices = @transform_6, window_bounds = array<i64: 1>}, {transform_indices = @transform_7, window_bounds = array<i64: 128, 1>}]} {
    %c0 = arith.constant 0 : index
    %c0_0 = arith.constant 0 : index
    %0 = vector.load %arg1[%c0, %c0_0] : memref<128x128xbf16, #tpu.memory_space<vmem>>, vector<128x128xbf16>
    %cst = arith.constant 0.000000e+00 : f32
    %1 = vector.broadcast %cst : f32 to vector<128x128xf32>
    %c0_1 = arith.constant 0 : index
    %c0_2 = arith.constant 0 : index
    %2 = vector.load %arg2[%c0_1, %c0_2] : memref<128x128xbf16, #tpu.memory_space<vmem>>, vector<128x128xbf16>
    %c0_3 = arith.constant 0 : index
    %c0_4 = arith.constant 0 : index
    %3 = vector.load %arg3[%c0_3, %c0_4] : memref<1x128xf32, #tpu.memory_space<vmem>>, vector<1x128xf32>
    %cst_5 = arith.constant dense<0.000000e+00> : vector<128x128xf32>
    %4 = tpu.matmul %0, %2, %cst_5 {dimension_numbers = #tpu.dot_dimension_numbers<[1], [0], [0], [1], [0, 0, 1, 1], [], []>} : vector<128x128xbf16>, vector<128x128xbf16>, vector<128x128xf32> -> vector<128x128xf32>
    %5 = vector.broadcast %3 : vector<1x128xf32> to vector<128x128xf32>
    %6 = arith.addf %4, %5 : vector<128x128xf32>
    %cst_6 = arith.constant 0.000000e+00 : f32
    %7 = vector.broadcast %cst_6 : f32 to vector<128x128xf32>
    %8 = arith.maximumf %6, %7 : vector<128x128xf32>
    %c0_7 = arith.constant 0 : index
    %c0_8 = arith.constant 0 : index
    %9 = vector.load %arg4[%c0_7, %c0_8] : memref<128x128xbf16, #tpu.memory_space<vmem>>, vector<128x128xbf16>
    %10 = arith.truncf %8 : vector<128x128xf32> to vector<128x128xbf16>
    %cst_9 = arith.constant dense<0.000000e+00> : vector<128x128xf32>
    %11 = tpu.matmul %10, %9, %cst_9 {dimension_numbers = #tpu.dot_dimension_numbers<[1], [0], [0], [1], [0, 0, 1, 1], [], []>} : vector<128x128xbf16>, vector<128x128xbf16>, vector<128x128xf32> -> vector<128x128xf32>
    %12 = arith.addf %1, %11 : vector<128x128xf32>
    %c0_10 = arith.constant 0 : index
    %c0_11 = arith.constant 0 : index
    %13 = vector.load %arg5[%c0_10, %c0_11] : memref<1x128xf32, #tpu.memory_space<vmem>>, vector<1x128xf32>
    %14 = vector.broadcast %13 : vector<1x128xf32> to vector<128x128xf32>
    %15 = arith.addf %12, %14 : vector<128x128xf32>
    %cst_12 = arith.constant 0.000000e+00 : f32
    %16 = vector.broadcast %cst_12 : f32 to vector<128x128xf32>
    %17 = arith.maximumf %15, %16 : vector<128x128xf32>
    %c0_13 = arith.constant 0 : index
    %c0_14 = arith.constant 0 : index
    %18 = vector.load %arg6[%c0_13, %c0_14] : memref<1x128xf32, #tpu.memory_space<vmem>>, vector<1x128xf32>
    %19 = vector.broadcast %18 : vector<1x128xf32> to vector<128x128xf32>
    %20 = arith.mulf %17, %19 : vector<128x128xf32>
    %cst_15 = arith.constant dense<0.000000e+00> : vector<128xf32>
    %21 = vector.multi_reduction <add>, %20, %cst_15 [1] : vector<128x128xf32> to vector<128xf32>
    %22 = vector.shape_cast %21 : vector<128xf32> to vector<128x1xf32>
    %c0_16 = arith.constant 0 : index
    %23 = memref.load %arg7[%c0_16] : memref<1xf32, #tpu.memory_space<smem>>
    %24 = vector.broadcast %23 : f32 to vector<128x1xf32>
    %25 = arith.addf %22, %24 : vector<128x1xf32>
    %26 = arith.negf %25 : vector<128x1xf32>
    %27 = math.exp %26 : vector<128x1xf32>
    %cst_17 = arith.constant 1.000000e+00 : f32
    %28 = vector.broadcast %cst_17 : f32 to vector<128x1xf32>
    %29 = arith.addf %28, %27 : vector<128x1xf32>
    %30 = arith.divf %28, %29 : vector<128x1xf32>
    %c0_18 = arith.constant 0 : index
    %c0_19 = arith.constant 0 : index
    %31 = vector.load %arg8[%c0_18, %c0_19] : memref<128x1xf32, #tpu.memory_space<vmem>>, vector<128x1xf32>
    tpu.vector_store %arg8[%c0_18, %c0_19], %30 {strides = array<i32>} : memref<128x1xf32, #tpu.memory_space<vmem>>, vector<128x1xf32>,
    return
  }
  func.func @transform_0(%arg0: i32) -> (i32, i32) {
    %c0_i32 = arith.constant 0 : i32
    %c0_i32_0 = arith.constant 0 : i32
    return %arg0, %c0_i32 : i32, i32
  }
  func.func @transform_1(%arg0: i32) -> (i32, i32) {
    %c0_i32 = arith.constant 0 : i32
    %c0_i32_0 = arith.constant 0 : i32
    %c0_i32_1 = arith.constant 0 : i32
    return %c0_i32, %c0_i32_0 : i32, i32
  }
  func.func @transform_2(%arg0: i32) -> (i32, i32) {
    %c0_i32 = arith.constant 0 : i32
    %c0_i32_0 = arith.constant 0 : i32
    %c0_i32_1 = arith.constant 0 : i32
    return %c0_i32, %c0_i32_0 : i32, i32
  }
  func.func @transform_3(%arg0: i32) -> (i32, i32) {
    %c0_i32 = arith.constant 0 : i32
    %c0_i32_0 = arith.constant 0 : i32
    %c0_i32_1 = arith.constant 0 : i32
    return %c0_i32, %c0_i32_0 : i32, i32
  }
  func.func @transform_4(%arg0: i32) -> (i32, i32) {
    %c0_i32 = arith.constant 0 : i32
    %c0_i32_0 = arith.constant 0 : i32
    %c0_i32_1 = arith.constant 0 : i32
    return %c0_i32, %c0_i32_0 : i32, i32
  }
  func.func @transform_5(%arg0: i32) -> (i32, i32) {
    %c0_i32 = arith.constant 0 : i32
    %c0_i32_0 = arith.constant 0 : i32
    %c0_i32_1 = arith.constant 0 : i32
    return %c0_i32, %c0_i32_0 : i32, i32
  }
  func.func @transform_6(%arg0: i32) -> i32 {
    %c0_i32 = arith.constant 0 : i32
    %c0_i32_0 = arith.constant 0 : i32
    return %c0_i32 : i32
  }
  func.func @transform_7(%arg0: i32) -> (i32, i32) {
    %c0_i32 = arith.constant 0 : i32
    %c0_i32_0 = arith.constant 0 : i32
    return %arg0, %c0_i32 : i32, i32
  }
}

module attributes {stable_mosaic.version = 11 : i64} {
  func.func @kernel(%arg0: i32, %arg1: memref<128x128xbf16, #tpu.memory_space<vmem>>, %arg2: memref<128x128xbf16, #tpu.memory_space<vmem>>, %arg3: memref<1x128xf32, #tpu.memory_space<vmem>>, %arg4: memref<128x128xbf16, #tpu.memory_space<vmem>>, %arg5: memref<1x128xf32, #tpu.memory_space<vmem>>, %arg6: memref<1x128xf32, #tpu.memory_space<vmem>>, %arg7: memref<1xf32, #tpu.memory_space<smem>>, %arg8: memref<128x1xf32, #tpu.memory_space<vmem>>) attributes {dimension_semantics = [#tpu.dimension_semantics<parallel>], iteration_bounds = array<i64: 1>, scalar_prefetch = 0 : i64, scratch_operands = 0 : i64, tpu.core_type = #tpu.core_type<tc>, window_params = [{transform_indices = @transform_0, window_bounds = array<i64: 128, 128>}, {pipeline_mode = #tpu.pipeline_mode<synchronous>, transform_indices = @transform_1, window_bounds = array<i64: 128, 128>}, {pipeline_mode = #tpu.pipeline_mode<synchronous>, transform_indices = @transform_2, window_bounds = array<i64: 1, 128>}, {pipeline_mode = #tpu.pipeline_mode<synchronous>, transform_indices = @transform_3, window_bounds = array<i64: 128, 128>}, {pipeline_mode = #tpu.pipeline_mode<synchronous>, transform_indices = @transform_4, window_bounds = array<i64: 1, 128>}, {pipeline_mode = #tpu.pipeline_mode<synchronous>, transform_indices = @transform_5, window_bounds = array<i64: 1, 128>}, {transform_indices = @transform_6, window_bounds = array<i64: 1>}, {transform_indices = @transform_7, window_bounds = array<i64: 128, 1>}]} {
    %c0 = arith.constant 0 : index
    %c0_0 = arith.constant 0 : index
    %0 = vector.load %arg1[%c0, %c0_0] : memref<128x128xbf16, #tpu.memory_space<vmem>>, vector<128x128xbf16>
    %cst = arith.constant 0.000000e+00 : f32
    %1 = vector.broadcast %cst : f32 to vector<128x128xf32>
    %c0_1 = arith.constant 0 : index
    %c0_2 = arith.constant 0 : index
    %2 = vector.load %arg2[%c0_1, %c0_2] : memref<128x128xbf16, #tpu.memory_space<vmem>>, vector<128x128xbf16>
    %c0_3 = arith.constant 0 : index
    %c0_4 = arith.constant 0 : index
    %3 = vector.load %arg3[%c0_3, %c0_4] : memref<1x128xf32, #tpu.memory_space<vmem>>, vector<1x128xf32>
    %cst_5 = arith.constant dense<0.000000e+00> : vector<128x128xf32>
    %4 = tpu.matmul %0, %2, %cst_5 {dimension_numbers = #tpu.dot_dimension_numbers<[1], [0], [0], [1], [0, 0, 1, 1], [], []>} : vector<128x128xbf16>, vector<128x128xbf16>, vector<128x128xf32> -> vector<128x128xf32>
    %5 = vector.broadcast %3 : vector<1x128xf32> to vector<128x128xf32>
    %6 = arith.addf %4, %5 : vector<128x128xf32>
    %cst_6 = arith.constant 0.000000e+00 : f32
    %7 = vector.broadcast %cst_6 : f32 to vector<128x128xf32>
    %8 = arith.maximumf %6, %7 : vector<128x128xf32>
    %c0_7 = arith.constant 0 : index
    %c0_8 = arith.constant 0 : index
    %9 = vector.load %arg4[%c0_7, %c0_8] : memref<128x128xbf16, #tpu.memory_space<vmem>>, vector<128x128xbf16>
    %10 = arith.truncf %8 : vector<128x128xf32> to vector<128x128xbf16>
    %cst_9 = arith.constant dense<0.000000e+00> : vector<128x128xf32>
    %11 = tpu.matmul %10, %9, %cst_9 {dimension_numbers = #tpu.dot_dimension_numbers<[1], [0], [0], [1], [0, 0, 1, 1], [], []>} : vector<128x128xbf16>, vector<128x128xbf16>, vector<128x128xf32> -> vector<128x128xf32>
    %12 = arith.addf %1, %11 : vector<128x128xf32>
    %c0_10 = arith.constant 0 : index
    %c0_11 = arith.constant 0 : index
    %13 = vector.load %arg5[%c0_10, %c0_11] : memref<1x128xf32, #tpu.memory_space<vmem>>, vector<1x128xf32>
    %14 = vector.broadcast %13 : vector<1x128xf32> to vector<128x128xf32>
    %15 = arith.addf %12, %14 : vector<128x128xf32>
    %cst_12 = arith.constant 0.000000e+00 : f32
    %16 = vector.broadcast %cst_12 : f32 to vector<128x128xf32>
    %17 = arith.maximumf %15, %16 : vector<128x128xf32>
    %c0_13 = arith.constant 0 : index
    %c0_14 = arith.constant 0 : index
    %18 = vector.load %arg6[%c0_13, %c0_14] : memref<1x128xf32, #tpu.memory_space<vmem>>, vector<1x128xf32>
    %19 = vector.broadcast %18 : vector<1x128xf32> to vector<128x128xf32>
    %20 = arith.mulf %17, %19 : vector<128x128xf32>
    %cst_15 = arith.constant dense<0.000000e+00> : vector<128xf32>
    %21 = vector.multi_reduction <add>, %20, %cst_15 [1] : vector<128x128xf32> to vector<128xf32>
    %22 = vector.shape_cast %21 : vector<128xf32> to vector<128x1xf32>
    %c0_16 = arith.constant 0 : index
    %23 = memref.load %arg7[%c0_16] : memref<1xf32, #tpu.memory_space<smem>>
    %24 = vector.broadcast %23 : f32 to vector<128x1xf32>
    %25 = arith.addf %22, %24 : vector<128x1xf32>
    %26 = arith.negf %25 : vector<128x1xf32>
    %27 = math.exp %26 : vector<128x1xf32>
    %cst_17 = arith.constant 1.000000e+00 : f32
    %28 = vector.broadcast %cst_17 : f32 to vector<128x1xf32>
    %29 = arith.addf %28, %27 : vector<128x1xf32>
    %30 = arith.divf %28, %29 : vector<128x1xf32>
    %c0_18 = arith.constant 0 : index
    %c0_19 = arith.constant 0 : index
    %31 = vector.load %arg8[%c0_18, %c0_19] : memref<128x1xf32, #tpu.memory_space<vmem>>, vector<128x1xf32>
    tpu.vector_store %arg8[%c0_18, %c0_19], %30 {strides = array<i32>} : memref<128x1xf32, #tpu.memory_space<vmem>>, vector<128x1xf32>,
    return
  }
  func.func @transform_0(%arg0: i32) -> (i32, i32) {
    %c0_i32 = arith.constant 0 : i32
    %c0_i32_0 = arith.constant 0 : i32
    return %arg0, %c0_i32 : i32, i32
  }
  func.func @transform_1(%arg0: i32) -> (i32, i32) {
    %c0_i32 = arith.constant 0 : i32
    %c0_i32_0 = arith.constant 0 : i32
    %c0_i32_1 = arith.constant 0 : i32
    return %c0_i32, %c0_i32_0 : i32, i32
  }
  func.func @transform_2(%arg0: i32) -> (i32, i32) {
    %c0_i32 = arith.constant 0 : i32
    %c0_i32_0 = arith.constant 0 : i32
    %c0_i32_1 = arith.constant 0 : i32
    return %c0_i32, %c0_i32_0 : i32, i32
  }
  func.func @transform_3(%arg0: i32) -> (i32, i32) {
    %c0_i32 = arith.constant 0 : i32
    %c0_i32_0 = arith.constant 0 : i32
    %c0_i32_1 = arith.constant 0 : i32
    return %c0_i32, %c0_i32_0 : i32, i32
  }
  func.func @transform_4(%arg0: i32) -> (i32, i32) {
    %c0_i32 = arith.constant 0 : i32
    %c0_i32_0 = arith.constant 0 : i32
    %c0_i32_1 = arith.constant 0 : i32
    return %c0_i32, %c0_i32_0 : i32, i32
  }
  func.func @transform_5(%arg0: i32) -> (i32, i32) {
    %c0_i32 = arith.constant 0 : i32
    %c0_i32_0 = arith.constant 0 : i32
    %c0_i32_1 = arith.constant 0 : i32
    return %c0_i32, %c0_i32_0 : i32, i32
  }
  func.func @transform_6(%arg0: i32) -> i32 {
    %c0_i32 = arith.constant 0 : i32
    %c0_i32_0 = arith.constant 0 : i32
    return %c0_i32 : i32
  }
  func.func @transform_7(%arg0: i32) -> (i32, i32) {
    %c0_i32 = arith.constant 0 : i32
    %c0_i32_0 = arith.constant 0 : i32
    return %arg0, %c0_i32 : i32, i32
  }
}

</mosaic_0001>

<llo_original>
// kernel: tpu_custom_call.1
$region0: #{tpu_custom_call.1}
  #allocation0 [shape = 'u32[]', space=smem, size = 0x4, offset = 0x4, fixed_abs, tag = 'smem constant byte address 0x4 - core index']
  #allocation1 [shape = 'u32[144,128]{1,0:T(1,128)}', space=vmem, size = 0x12000, scoped, tag = 'internal scratch']
  #allocation2 [shape = 'f32[1]{0:T(128)S(6)}', space=smem, size = 0x200, scoped, tag = 'scoped memory for tpu_custom_call.1']
  %s0 = inlined_call_operand.hbm [shape: bf16[128,128], index: 0, kind: input, shape index: {}]
  %s1 = inlined_call_operand.hbm [shape: bf16[128,128], index: 1, kind: input, shape index: {}]
  %s2 = inlined_call_operand.vmem [shape: f32[1,128], index: 2, kind: input, shape index: {}]
  %s3 = inlined_call_operand.hbm [shape: bf16[128,128], index: 3, kind: input, shape index: {}]
  %s4 = inlined_call_operand.vmem [shape: f32[1,128], index: 4, kind: input, shape index: {}]
  %s5 = inlined_call_operand.vmem [shape: f32[1,128], index: 5, kind: input, shape index: {}]
  %s6 = inlined_call_operand.<no memory space> [shape: f32[1], index: 6, kind: input, shape index: {}]
  %s7 = inlined_call_operand.vmem [shape: f32[128,1], index: 7, kind: output, shape index: {}]
  %s8 = sld [smem:[#allocation0]]
  $region50: #{tpu_custom_call.1} parent=0
    _
  %s10 = ssub.s32 1, %s8
  %s11 = scalar_select 0, %s10, %s8
  %12 = sst [smem:[#allocation2]] %s6
  $region1: #{tpu_custom_call.1} parent=0
    #allocation3 [shape = 'u8[32768]{0}', space=vmem, size = 0x8000, scoped, tag = 'input window, operand 0, single buffered']
    #allocation4 [shape = 's32[1]{0}', space=sflag, size = 0x4, scoped, tag = 'scoped memory for tpu_custom_call.1']
    #allocation5 [shape = 'u8[32768]{0}', space=vmem, size = 0x8000, scoped, tag = 'input window, operand 1, single buffered']
    #allocation6 [shape = 's32[1]{0}', space=sflag, size = 0x4, scoped, tag = 'scoped memory for tpu_custom_call.1']
    #allocation7 [shape = 'u8[32768]{0}', space=vmem, size = 0x8000, scoped, tag = 'input window, operand 3, single buffered']
    %13 = vsyncpa [#allocation4], 0
    %14 = vsyncpa [#allocation6], 0
    // Predicated region
    $region2: #{tpu_custom_call.1} parent=1 // pred_check
      _
    $region3: #{tpu_custom_call.1} parent=1 // pred_check_branch
      %16 = sbr.rel (0) target = $region5
    $region4: #{tpu_custom_call.1} parent=1 // pred_region
      %s18 = ssub.s32 1024, 1024
      %19 = vsyncadd [#allocation4], %s18
      %s20 = sshll.u32 [#allocation3], 4
      %s21 = int_to_ptr.vmem [resolvable:$true] %s20
      %26 = dma.hbm_to_vmem [thread:$0]  %s0, 1024, %s21, [#allocation4], 64, 64, 4
    $region5: #{tpu_custom_call.1} parent=1 // pred_fallthru
      _
    // Predicated region
    $region6: #{tpu_custom_call.1} parent=1 // pred_check
      _
    $region7: #{tpu_custom_call.1} parent=1 // pred_check_branch
      %28 = sbr.rel (0) target = $region9
    $region8: #{tpu_custom_call.1} parent=1 // pred_region
      %s30 = ssub.s32 1024, 1024
      %31 = vsyncadd [#allocation6], %s30
      %s32 = sshll.u32 [#allocation5], 4
      %s33 = int_to_ptr.vmem [resolvable:$true] %s32
      %38 = dma.hbm_to_vmem [thread:$0]  %s1, 1024, %s33, [#allocation6], 64, 64, 4
    $region9: #{tpu_custom_call.1} parent=1 // pred_fallthru
      _
    // Predicated region
    $region10: #{tpu_custom_call.1} parent=1 // pred_check
      _
    $region11: #{tpu_custom_call.1} parent=1 // pred_check_branch
      %40 = sbr.rel (0) target = $region13
    $region12: #{tpu_custom_call.1} parent=1 // pred_region
      _
    $region13: #{tpu_custom_call.1} parent=1 // pred_fallthru
      _
    // Predicated region
    $region14: #{tpu_custom_call.1} parent=1 // pred_check
      _
    $region15: #{tpu_custom_call.1} parent=1 // pred_check_branch
      %42 = sbr.rel (0) target = $region17
    $region16: #{tpu_custom_call.1} parent=1 // pred_region
      %s44 = ssub.s32 1024, 1024
      %45 = vsyncadd [#allocation6], %s44
      %s46 = sshll.u32 [#allocation7], 4
      %s47 = int_to_ptr.vmem [resolvable:$true] %s46
      %52 = dma.hbm_to_vmem [thread:$0]  %s3, 1024, %s47, [#allocation6], 64, 64, 4
    $region17: #{tpu_custom_call.1} parent=1 // pred_fallthru
      _
    // Predicated region
    $region18: #{tpu_custom_call.1} parent=1 // pred_check
      _
    $region19: #{tpu_custom_call.1} parent=1 // pred_check_branch
      %54 = sbr.rel (0) target = $region21
    $region20: #{tpu_custom_call.1} parent=1 // pred_region
      _
    $region21: #{tpu_custom_call.1} parent=1 // pred_fallthru
      _
    // Predicated region
    $region22: #{tpu_custom_call.1} parent=1 // pred_check
      _
    $region23: #{tpu_custom_call.1} parent=1 // pred_check_branch
      %56 = sbr.rel (0) target = $region25
    $region24: #{tpu_custom_call.1} parent=1 // pred_region
      _
    $region25: #{tpu_custom_call.1} parent=1 // pred_fallthru
      _
    // Predicated region
    $region26: #{tpu_custom_call.1} parent=1 // pred_check
      _
    $region27: #{tpu_custom_call.1} parent=1 // pred_check_branch
      %58 = sbr.rel (0) target = $region29
    $region28: #{tpu_custom_call.1} parent=1 // pred_region
      _
    $region29: #{tpu_custom_call.1} parent=1 // pred_fallthru
      _
    // Predicated region
    $region30: #{tpu_custom_call.1} parent=1 // pred_check
      _
    $region31: #{tpu_custom_call.1} parent=1 // pred_check_branch
      %60 = sbr.rel (0) target = $region33
    $region32: #{tpu_custom_call.1} parent=1 // pred_region
      %61 = dma.done [#allocation4], 1024
    $region33: #{tpu_custom_call.1} parent=1 // pred_fallthru
      _
    // Predicated region
    $region34: #{tpu_custom_call.1} parent=1 // pred_check
      _
    $region35: #{tpu_custom_call.1} parent=1 // pred_check_branch
      %63 = sbr.rel (0) target = $region37
    $region36: #{tpu_custom_call.1} parent=1 // pred_region
      %64 = dma.done [#allocation6], 1024
    $region37: #{tpu_custom_call.1} parent=1 // pred_fallthru
      _
    // Predicated region
    $region38: #{tpu_custom_call.1} parent=1 // pred_check
      _
    $region39: #{tpu_custom_call.1} parent=1 // pred_check_branch
      %66 = sbr.rel (0) target = $region41
    $region40: #{tpu_custom_call.1} parent=1 // pred_region
      %67 = dma.done [#allocation6], 1024
    $region41: #{tpu_custom_call.1} parent=1 // pred_fallthru
      _
    %v69 = vld [vmem:[#allocation3] sm:$0xf]
    %v70 = vld [vmem:[#allocation3 + $0x4] sm:$0xf]
    %v71 = vld [vmem:[#allocation3 + $0x8] sm:$0xf]
    %v72 = vld [vmem:[#allocation3 + $0xc] sm:$0xf]
    %v73 = vld [vmem:[#allocation3 + $0x10] sm:$0xf]
    %v74 = vld [vmem:[#allocation3 + $0x14] sm:$0xf]
    %v75 = vld [vmem:[#allocation3 + $0x18] sm:$0xf]
    %v76 = vld [vmem:[#allocation3 + $0x1c] sm:$0xf]
    %v77 = vld [vmem:[#allocation3 + $0x20] sm:$0xf]
    %v78 = vld [vmem:[#allocation3 + $0x24] sm:$0xf]
    %v79 = vld [vmem:[#allocation3 + $0x28] sm:$0xf]
    %v80 = vld [vmem:[#allocation3 + $0x2c] sm:$0xf]
    %v81 = vld [vmem:[#allocation3 + $0x30] sm:$0xf]
    %v82 = vld [vmem:[#allocation3 + $0x34] sm:$0xf]
    %v83 = vld [vmem:[#allocation3 + $0x38] sm:$0xf]
    %v84 = vld [vmem:[#allocation3 + $0x3c] sm:$0xf]
    %v85 = vld [vmem:[#allocation5] sm:$0xf]
    %v86 = vld [vmem:[#allocation5 + $0x4] sm:$0xf]
    %v87 = vld [vmem:[#allocation5 + $0x8] sm:$0xf]
    %v88 = vld [vmem:[#allocation5 + $0xc] sm:$0xf]
    %v89 = vld [vmem:[#allocation5 + $0x10] sm:$0xf]
    %v90 = vld [vmem:[#allocation5 + $0x14] sm:$0xf]
    %v91 = vld [vmem:[#allocation5 + $0x18] sm:$0xf]
    %v92 = vld [vmem:[#allocation5 + $0x1c] sm:$0xf]
    %v93 = vld [vmem:[#allocation5 + $0x20] sm:$0xf]
    %v94 = vld [vmem:[#allocation5 + $0x24] sm:$0xf]
    %v95 = vld [vmem:[#allocation5 + $0x28] sm:$0xf]
    %v96 = vld [vmem:[#allocation5 + $0x2c] sm:$0xf]
    %v97 = vld [vmem:[#allocation5 + $0x30] sm:$0xf]
    %v98 = vld [vmem:[#allocation5 + $0x34] sm:$0xf]
    %v99 = vld [vmem:[#allocation5 + $0x38] sm:$0xf]
    %v100 = vld [vmem:[#allocation5 + $0x3c] sm:$0xf]
    %v101 = vld [vmem:[%s2] sm:$0x1]
    %v103 = vlaneseq
    %v104 = vshrl.u32 %v103, 7
    %v105 = vsub.s32 0, %v104
    %v106 = vrot.slane %v101, %v105
    %v124 = vunpack.c.l.b16 %v69
    %v125 = vunpack.c.l.b16 %v70
    %v126 = vunpack.c.l.b16 %v71
    %v127 = vunpack.c.l.b16 %v72
    %v128 = vunpack.c.l.b16 %v73
    %v129 = vunpack.c.l.b16 %v74
    %v130 = vunpack.c.l.b16 %v75
    %v131 = vunpack.c.l.b16 %v76
    %v132 = vunpack.c.l.b16 %v77
    %v133 = vunpack.c.l.b16 %v78
    %v134 = vunpack.c.l.b16 %v79
    %v135 = vunpack.c.l.b16 %v80
    %v136 = vunpack.c.l.b16 %v81
    %v137 = vunpack.c.l.b16 %v82
    %v138 = vunpack.c.l.b16 %v83
    %v139 = vunpack.c.l.b16 %v84
    %v140 = vpack.c.b16 %v125, %v124
    %v141 = vpack.c.b16 %v127, %v126
    %v142 = vpack.c.b16 %v129, %v128
    %v143 = vpack.c.b16 %v131, %v130
    %v144 = vpack.c.b16 %v133, %v132
    %v145 = vpack.c.b16 %v135, %v134
    %v146 = vpack.c.b16 %v137, %v136
    %v147 = vpack.c.b16 %v139, %v138
    %v172 = vunpack.c.l.b16 %v85
    %v173 = vunpack.c.l.b16 %v86
    %v174 = vunpack.c.l.b16 %v87
    %v175 = vunpack.c.l.b16 %v88
    %v176 = vunpack.c.l.b16 %v89
    %v177 = vunpack.c.l.b16 %v90
    %v178 = vunpack.c.l.b16 %v91
    %v179 = vunpack.c.l.b16 %v92
    %v180 = vunpack.c.l.b16 %v93
    %v181 = vunpack.c.l.b16 %v94
    %v182 = vunpack.c.l.b16 %v95
    %v183 = vunpack.c.l.b16 %v96
    %v184 = vunpack.c.l.b16 %v97
    %v185 = vunpack.c.l.b16 %v98
    %v186 = vunpack.c.l.b16 %v99
    %v187 = vunpack.c.l.b16 %v100
    %v188 = vpack.c.b16 %v173, %v172
    %v189 = vpack.c.b16 %v175, %v174
    %v190 = vpack.c.b16 %v177, %v176
    %v191 = vpack.c.b16 %v179, %v178
    %v192 = vpack.c.b16 %v181, %v180
    %v193 = vpack.c.b16 %v183, %v182
    %v194 = vpack.c.b16 %v185, %v184
    %v195 = vpack.c.b16 %v187, %v186
    %204 = vmatprep.subr.bf16.mxu0 0
    %205 = vmatpush1.bf16.msra.mxu0 %v188
    %206 = vmatprep.subr.bf16.mxu0 0
    %207 = vmatpush1.bf16.msra.mxu0 %v189
    %208 = vmatprep.subr.bf16.mxu0 0
    %209 = vmatpush1.bf16.msra.mxu0 %v190
    %210 = vmatprep.subr.bf16.mxu0 0
    %211 = vmatpush1.bf16.msra.mxu0 %v191
    %212 = vmatprep.subr.bf16.mxu0 0
    %213 = vmatpush1.bf16.msra.mxu0 %v192
    %214 = vmatprep.subr.bf16.mxu0 0
    %215 = vmatpush1.bf16.msra.mxu0 %v193
    %216 = vmatprep.subr.bf16.mxu0 0
    %217 = vmatpush1.bf16.msra.mxu0 %v194
    %218 = vmatprep.subr.bf16.mxu0 0
    %219 = vmatpush1.bf16.msra.mxu0 %v195
    %220 = vmatprep.subr.bf16.mxu0 0
    %221 = vmatpush1.bf16.msra.mxu0 0
    %222 = vmatprep.subr.bf16.mxu0 0
    %223 = vmatpush1.bf16.msra.mxu0 0
    %224 = vmatprep.subr.bf16.mxu0 0
    %225 = vmatpush1.bf16.msra.mxu0 0
    %226 = vmatprep.subr.bf16.mxu0 0
    %227 = vmatpush1.bf16.msra.mxu0 0
    %228 = vmatprep.subr.bf16.mxu0 0
    %229 = vmatpush1.bf16.msra.mxu0 0
    %230 = vmatprep.subr.bf16.mxu0 0
    %231 = vmatpush1.bf16.msra.mxu0 0
    %232 = vmatprep.subr.bf16.mxu0 0
    %233 = vmatpush1.bf16.msra.mxu0 0
    %234 = vmatprep.subr.bf16.mxu0 0
    %235 = vmatpush1.bf16.msra.mxu0 0
    %236 = vmatprep.mubr.bf16.mxu0 0
    %237 = vmatmul.mubr.bf16.gmra.mrb[0].mxu0 %v140
    %v238 = vpop.f32.mrb[0].mxu0
    %v239 = vadd.f32 %v106, %v238
    %v240 = vpop.f32.mrb[0].mxu0
    %v241 = vpop.f32.mrb[0].mxu0
    %v242 = vadd.f32 %v106, %v241
    %v243 = vpop.f32.mrb[0].mxu0
    %244 = vmatprep.mubr.bf16.mxu0 0
    %245 = vmatmul.mubr.bf16.gmra.mrb[0].mxu0 %v141
    %v246 = vpop.f32.mrb[0].mxu0
    %v247 = vadd.f32 %v106, %v246
    %v248 = vpop.f32.mrb[0].mxu0
    %v249 = vpop.f32.mrb[0].mxu0
    %v250 = vadd.f32 %v106, %v249
    %v251 = vpop.f32.mrb[0].mxu0
    %252 = vmatprep.mubr.bf16.mxu0 0
    %253 = vmatmul.mubr.bf16.gmra.mrb[0].mxu0 %v142
    %v254 = vpop.f32.mrb[0].mxu0
    %v255 = vadd.f32 %v106, %v254
    %v256 = vpop.f32.mrb[0].mxu0
    %v257 = vpop.f32.mrb[0].mxu0
    %v258 = vadd.f32 %v106, %v257
    %v259 = vpop.f32.mrb[0].mxu0
    %260 = vmatprep.mubr.bf16.mxu0 0
    %261 = vmatmul.mubr.bf16.gmra.mrb[0].mxu0 %v143
    %v262 = vpop.f32.mrb[0].mxu0
    %v263 = vadd.f32 %v106, %v262
    %v264 = vpop.f32.mrb[0].mxu0
    %v265 = vpop.f32.mrb[0].mxu0
    %v266 = vadd.f32 %v106, %v265
    %v267 = vpop.f32.mrb[0].mxu0
    %268 = vmatprep.mubr.bf16.mxu0 0
    %269 = vmatmul.mubr.bf16.gmra.mrb[0].mxu0 %v144
    %v270 = vpop.f32.mrb[0].mxu0
    %v271 = vadd.f32 %v106, %v270
    %v272 = vpop.f32.mrb[0].mxu0
    %v273 = vpop.f32.mrb[0].mxu0
    %v274 = vadd.f32 %v106, %v273
    %v275 = vpop.f32.mrb[0].mxu0
    %276 = vmatprep.mubr.bf16.mxu0 0
    %277 = vmatmul.mubr.bf16.gmra.mrb[0].mxu0 %v145
    %v278 = vpop.f32.mrb[0].mxu0
    %v279 = vadd.f32 %v106, %v278
    %v280 = vpop.f32.mrb[0].mxu0
    %v281 = vpop.f32.mrb[0].mxu0
    %v282 = vadd.f32 %v106, %v281
    %v283 = vpop.f32.mrb[0].mxu0
    %284 = vmatprep.mubr.bf16.mxu0 0
    %285 = vmatmul.mubr.bf16.gmra.mrb[0].mxu0 %v146
    %v286 = vpop.f32.mrb[0].mxu0
    %v287 = vadd.f32 %v106, %v286
    %v288 = vpop.f32.mrb[0].mxu0
    %v289 = vpop.f32.mrb[0].mxu0
    %v290 = vadd.f32 %v106, %v289
    %v291 = vpop.f32.mrb[0].mxu0
    %292 = vmatprep.mubr.bf16.mxu0 0
    %293 = vmatmul.mubr.bf16.gmra.mrb[0].mxu0 %v147
    %v294 = vpop.f32.mrb[0].mxu0
    %v295 = vadd.f32 %v106, %v294
    %v296 = vpop.f32.mrb[0].mxu0
    %v297 = vpop.f32.mrb[0].mxu0
    %v298 = vadd.f32 %v106, %v297
    %v299 = vpop.f32.mrb[0].mxu0
    %300 = vdwg.mxu0
    %v301 = vmax.f32 %v239, 0.0
    %v302 = vmax.f32 %v242, 0.0
    %v303 = vmax.f32 %v247, 0.0
    %v304 = vmax.f32 %v250, 0.0
    %v305 = vmax.f32 %v255, 0.0
    %v306 = vmax.f32 %v258, 0.0
    %v307 = vmax.f32 %v263, 0.0
    %v308 = vmax.f32 %v266, 0.0
    %v309 = vmax.f32 %v271, 0.0
    %v310 = vmax.f32 %v274, 0.0
    %v311 = vmax.f32 %v279, 0.0
    %v312 = vmax.f32 %v282, 0.0
    %v313 = vmax.f32 %v287, 0.0
    %v314 = vmax.f32 %v290, 0.0
    %v315 = vmax.f32 %v295, 0.0
    %v316 = vmax.f32 %v298, 0.0
    %v317 = vld [vmem:[#allocation7] sm:$0xf]
    %v318 = vld [vmem:[#allocation7 + $0x4] sm:$0xf]
    %v319 = vld [vmem:[#allocation7 + $0x8] sm:$0xf]
    %v320 = vld [vmem:[#allocation7 + $0xc] sm:$0xf]
    %v321 = vld [vmem:[#allocation7 + $0x10] sm:$0xf]
    %v322 = vld [vmem:[#allocation7 + $0x14] sm:$0xf]
    %v323 = vld [vmem:[#allocation7 + $0x18] sm:$0xf]
    %v324 = vld [vmem:[#allocation7 + $0x1c] sm:$0xf]
    %v325 = vld [vmem:[#allocation7 + $0x20] sm:$0xf]
    %v326 = vld [vmem:[#allocation7 + $0x24] sm:$0xf]
    %v327 = vld [vmem:[#allocation7 + $0x28] sm:$0xf]
    %v328 = vld [vmem:[#allocation7 + $0x2c] sm:$0xf]
    %v329 = vld [vmem:[#allocation7 + $0x30] sm:$0xf]
    %v330 = vld [vmem:[#allocation7 + $0x34] sm:$0xf]
    %v331 = vld [vmem:[#allocation7 + $0x38] sm:$0xf]
    %v332 = vld [vmem:[#allocation7 + $0x3c] sm:$0xf]
    %v333 = vpack.c.bf16 %v302, %v301
    %v334 = vpack.c.bf16 %v304, %v303
    %v335 = vpack.c.bf16 %v306, %v305
    %v336 = vpack.c.bf16 %v308, %v307
    %v337 = vpack.c.bf16 %v310, %v309
    %v338 = vpack.c.bf16 %v312, %v311
    %v339 = vpack.c.bf16 %v314, %v313
    %v340 = vpack.c.bf16 %v316, %v315
    %v341 = vld [vmem:[%s4] sm:$0x1]
    %v343 = vlaneseq
    %v344 = vshrl.u32 %v343, 7
    %v345 = vsub.s32 0, %v344
    %v346 = vrot.slane %v341, %v345
    %v364 = vunpack.c.l.b16 %v317
    %v365 = vunpack.c.l.b16 %v318
    %v366 = vunpack.c.l.b16 %v319
    %v367 = vunpack.c.l.b16 %v320
    %v368 = vunpack.c.l.b16 %v321
    %v369 = vunpack.c.l.b16 %v322
    %v370 = vunpack.c.l.b16 %v323
    %v371 = vunpack.c.l.b16 %v324
    %v372 = vunpack.c.l.b16 %v325
    %v373 = vunpack.c.l.b16 %v326
    %v374 = vunpack.c.l.b16 %v327
    %v375 = vunpack.c.l.b16 %v328
    %v376 = vunpack.c.l.b16 %v329
    %v377 = vunpack.c.l.b16 %v330
    %v378 = vunpack.c.l.b16 %v331
    %v379 = vunpack.c.l.b16 %v332
    %v380 = vpack.c.b16 %v365, %v364
    %v381 = vpack.c.b16 %v367, %v366
    %v382 = vpack.c.b16 %v369, %v368
    %v383 = vpack.c.b16 %v371, %v370
    %v384 = vpack.c.b16 %v373, %v372
    %v385 = vpack.c.b16 %v375, %v374
    %v386 = vpack.c.b16 %v377, %v376
    %v387 = vpack.c.b16 %v379, %v378
    %396 = vmatprep.subr.bf16.mxu0 0
    %397 = vmatpush1.bf16.msra.mxu0 %v380
    %398 = vmatprep.subr.bf16.mxu0 0
    %399 = vmatpush1.bf16.msra.mxu0 %v381
    %400 = vmatprep.subr.bf16.mxu0 0
    %401 = vmatpush1.bf16.msra.mxu0 %v382
    %402 = vmatprep.subr.bf16.mxu0 0
    %403 = vmatpush1.bf16.msra.mxu0 %v383
    %404 = vmatprep.subr.bf16.mxu0 0
    %405 = vmatpush1.bf16.msra.mxu0 %v384
    %406 = vmatprep.subr.bf16.mxu0 0
    %407 = vmatpush1.bf16.msra.mxu0 %v385
    %408 = vmatprep.subr.bf16.mxu0 0
    %409 = vmatpush1.bf16.msra.mxu0 %v386
    %410 = vmatprep.subr.bf16.mxu0 0
    %411 = vmatpush1.bf16.msra.mxu0 %v387
    %412 = vmatprep.subr.bf16.mxu0 0
    %413 = vmatpush1.bf16.msra.mxu0 0
    %414 = vmatprep.subr.bf16.mxu0 0
    %415 = vmatpush1.bf16.msra.mxu0 0
    %416 = vmatprep.subr.bf16.mxu0 0
    %417 = vmatpush1.bf16.msra.mxu0 0
    %418 = vmatprep.subr.bf16.mxu0 0
    %419 = vmatpush1.bf16.msra.mxu0 0
    %420 = vmatprep.subr.bf16.mxu0 0
    %421 = vmatpush1.bf16.msra.mxu0 0
    %422 = vmatprep.subr.bf16.mxu0 0
    %423 = vmatpush1.bf16.msra.mxu0 0
    %424 = vmatprep.subr.bf16.mxu0 0
    %425 = vmatpush1.bf16.msra.mxu0 0
    %426 = vmatprep.subr.bf16.mxu0 0
    %427 = vmatpush1.bf16.msra.mxu0 0
    %428 = vmatprep.mubr.bf16.mxu0 0
    %429 = vmatmul.mubr.bf16.gmra.mrb[0].mxu0 %v333
    %v430 = vpop.f32.mrb[0].mxu0
    %v431 = vadd.f32 %v346, %v430
    %v432 = vpop.f32.mrb[0].mxu0
    %v433 = vpop.f32.mrb[0].mxu0
    %v434 = vadd.f32 %v346, %v433
    %v435 = vpop.f32.mrb[0].mxu0
    %436 = vmatprep.mubr.bf16.mxu0 0
    %437 = vmatmul.mubr.bf16.gmra.mrb[0].mxu0 %v334
    %v438 = vpop.f32.mrb[0].mxu0
    %v439 = vadd.f32 %v346, %v438
    %v440 = vpop.f32.mrb[0].mxu0
    %v441 = vpop.f32.mrb[0].mxu0
    %v442 = vadd.f32 %v346, %v441
    %v443 = vpop.f32.mrb[0].mxu0
    %444 = vmatprep.mubr.bf16.mxu0 0
    %445 = vmatmul.mubr.bf16.gmra.mrb[0].mxu0 %v335
    %v446 = vpop.f32.mrb[0].mxu0
    %v447 = vadd.f32 %v346, %v446
    %v448 = vpop.f32.mrb[0].mxu0
    %v449 = vpop.f32.mrb[0].mxu0
    %v450 = vadd.f32 %v346, %v449
    %v451 = vpop.f32.mrb[0].mxu0
    %452 = vmatprep.mubr.bf16.mxu0 0
    %453 = vmatmul.mubr.bf16.gmra.mrb[0].mxu0 %v336
    %v454 = vpop.f32.mrb[0].mxu0
    %v455 = vadd.f32 %v346, %v454
    %v456 = vpop.f32.mrb[0].mxu0
    %v457 = vpop.f32.mrb[0].mxu0
    %v458 = vadd.f32 %v346, %v457
    %v459 = vpop.f32.mrb[0].mxu0
    %460 = vmatprep.mubr.bf16.mxu0 0
    %461 = vmatmul.mubr.bf16.gmra.mrb[0].mxu0 %v337
    %v462 = vpop.f32.mrb[0].mxu0
    %v463 = vadd.f32 %v346, %v462
    %v464 = vpop.f32.mrb[0].mxu0
    %v465 = vpop.f32.mrb[0].mxu0
    %v466 = vadd.f32 %v346, %v465
    %v467 = vpop.f32.mrb[0].mxu0
    %468 = vmatprep.mubr.bf16.mxu0 0
    %469 = vmatmul.mubr.bf16.gmra.mrb[0].mxu0 %v338
    %v470 = vpop.f32.mrb[0].mxu0
    %v471 = vadd.f32 %v346, %v470
    %v472 = vpop.f32.mrb[0].mxu0
    %v473 = vpop.f32.mrb[0].mxu0
    %v474 = vadd.f32 %v346, %v473
    %v475 = vpop.f32.mrb[0].mxu0
    %476 = vmatprep.mubr.bf16.mxu0 0
    %477 = vmatmul.mubr.bf16.gmra.mrb[0].mxu0 %v339
    %v478 = vpop.f32.mrb[0].mxu0
    %v479 = vadd.f32 %v346, %v478
    %v480 = vpop.f32.mrb[0].mxu0
    %v481 = vpop.f32.mrb[0].mxu0
    %v482 = vadd.f32 %v346, %v481
    %v483 = vpop.f32.mrb[0].mxu0
    %484 = vmatprep.mubr.bf16.mxu0 0
    %485 = vmatmul.mubr.bf16.gmra.mrb[0].mxu0 %v340
    %v486 = vpop.f32.mrb[0].mxu0
    %v487 = vadd.f32 %v346, %v486
    %v488 = vpop.f32.mrb[0].mxu0
    %v489 = vpop.f32.mrb[0].mxu0
    %v490 = vadd.f32 %v346, %v489
    %v491 = vpop.f32.mrb[0].mxu0
    %492 = vdwg.mxu0
    %v493 = vmax.f32 %v431, 0.0
    %v494 = vmax.f32 %v434, 0.0
    %v495 = vmax.f32 %v439, 0.0
    %v496 = vmax.f32 %v442, 0.0
    %v497 = vmax.f32 %v447, 0.0
    %v498 = vmax.f32 %v450, 0.0
    %v499 = vmax.f32 %v455, 0.0
    %v500 = vmax.f32 %v458, 0.0
    %v501 = vmax.f32 %v463, 0.0
    %v502 = vmax.f32 %v466, 0.0
    %v503 = vmax.f32 %v471, 0.0
    %v504 = vmax.f32 %v474, 0.0
    %v505 = vmax.f32 %v479, 0.0
    %v506 = vmax.f32 %v482, 0.0
    %v507 = vmax.f32 %v487, 0.0
    %v508 = vmax.f32 %v490, 0.0
    %v509 = vld [vmem:[%s5] sm:$0x1]
    %v511 = vlaneseq
    %v512 = vshrl.u32 %v511, 7
    %v513 = vsub.s32 0, %v512
    %v514 = vrot.slane %v509, %v513
    %v516 = vmul.f32 %v493, %v514
    %v517 = vmul.f32 %v494, %v514
    %v518 = vmul.f32 %v495, %v514
    %v519 = vmul.f32 %v496, %v514
    %v520 = vmul.f32 %v497, %v514
    %v521 = vmul.f32 %v498, %v514
    %v522 = vmul.f32 %v499, %v514
    %v523 = vmul.f32 %v500, %v514
    %v524 = vmul.f32 %v501, %v514
    %v525 = vmul.f32 %v502, %v514
    %v526 = vmul.f32 %v503, %v514
    %v527 = vmul.f32 %v504, %v514
    %v528 = vmul.f32 %v505, %v514
    %v529 = vmul.f32 %v506, %v514
    %v530 = vmul.f32 %v507, %v514
    %v531 = vmul.f32 %v508, %v514
    %532 = vadd.xlane.f32.xlu0 %v516
    %v533 = vpop.xlane.xlu0 %532
    %534 = vadd.xlane.f32.xlu0 %v517
    %v535 = vpop.xlane.xlu0 %534
    %536 = vadd.xlane.f32.xlu0 %v518
    %v537 = vpop.xlane.xlu0 %536
    %538 = vadd.xlane.f32.xlu0 %v519
    %v539 = vpop.xlane.xlu0 %538
    %540 = vadd.xlane.f32.xlu0 %v520
    %v541 = vpop.xlane.xlu0 %540
    %542 = vadd.xlane.f32.xlu0 %v521
    %v543 = vpop.xlane.xlu0 %542
    %544 = vadd.xlane.f32.xlu0 %v522
    %v545 = vpop.xlane.xlu0 %544
    %546 = vadd.xlane.f32.xlu0 %v523
    %v547 = vpop.xlane.xlu0 %546
    %548 = vadd.xlane.f32.xlu0 %v524
    %v549 = vpop.xlane.xlu0 %548
    %550 = vadd.xlane.f32.xlu0 %v525
    %v551 = vpop.xlane.xlu0 %550
    %552 = vadd.xlane.f32.xlu0 %v526
    %v553 = vpop.xlane.xlu0 %552
    %554 = vadd.xlane.f32.xlu0 %v527
    %v555 = vpop.xlane.xlu0 %554
    %556 = vadd.xlane.f32.xlu0 %v528
    %v557 = vpop.xlane.xlu0 %556
    %558 = vadd.xlane.f32.xlu0 %v529
    %v559 = vpop.xlane.xlu0 %558
    %560 = vadd.xlane.f32.xlu0 %v530
    %v561 = vpop.xlane.xlu0 %560
    %562 = vadd.xlane.f32.xlu0 %v531
    %v563 = vpop.xlane.xlu0 %562
    %s564 = sld [smem:[#allocation2]]
    %v565 = vstv %s564
    %v566 = vadd.f32 %v533, %v565
    %v567 = vadd.f32 %v535, %v565
    %v568 = vadd.f32 %v537, %v565
    %v569 = vadd.f32 %v539, %v565
    %v570 = vadd.f32 %v541, %v565
    %v571 = vadd.f32 %v543, %v565
    %v572 = vadd.f32 %v545, %v565
    %v573 = vadd.f32 %v547, %v565
    %v574 = vadd.f32 %v549, %v565
    %v575 = vadd.f32 %v551, %v565
    %v576 = vadd.f32 %v553, %v565
    %v577 = vadd.f32 %v555, %v565
    %v578 = vadd.f32 %v557, %v565
    %v579 = vadd.f32 %v559, %v565
    %v580 = vadd.f32 %v561, %v565
    %v581 = vadd.f32 %v563, %v565
    %v582 = vxor.u32 %v566, 2147483648
    %v583 = vxor.u32 %v567, 2147483648
    %v584 = vxor.u32 %v568, 2147483648
    %v585 = vxor.u32 %v569, 2147483648
    %v586 = vxor.u32 %v570, 2147483648
    %v587 = vxor.u32 %v571, 2147483648
    %v588 = vxor.u32 %v572, 2147483648
    %v589 = vxor.u32 %v573, 2147483648
    %v590 = vxor.u32 %v574, 2147483648
    %v591 = vxor.u32 %v575, 2147483648
    %v592 = vxor.u32 %v576, 2147483648
    %v593 = vxor.u32 %v577, 2147483648
    %v594 = vxor.u32 %v578, 2147483648
    %v595 = vxor.u32 %v579, 2147483648
    %v596 = vxor.u32 %v580, 2147483648
    %v597 = vxor.u32 %v581, 2147483648
    %v598 = vmul.f32 %v582, 1.442695
    %v599 = vpow.pop %v598
    %v600 = vmul.f32 %v583, 1.442695
    %v601 = vpow.pop %v600
    %v602 = vmul.f32 %v584, 1.442695
    %v603 = vpow.pop %v602
    %v604 = vmul.f32 %v585, 1.442695
    %v605 = vpow.pop %v604
    %v606 = vmul.f32 %v586, 1.442695
    %v607 = vpow.pop %v606
    %v608 = vmul.f32 %v587, 1.442695
    %v609 = vpow.pop %v608
    %v610 = vmul.f32 %v588, 1.442695
    %v611 = vpow.pop %v610
    %v612 = vmul.f32 %v589, 1.442695
    %v613 = vpow.pop %v612
    %v614 = vmul.f32 %v590, 1.442695
    %v615 = vpow.pop %v614
    %v616 = vmul.f32 %v591, 1.442695
    %v617 = vpow.pop %v616
    %v618 = vmul.f32 %v592, 1.442695
    %v619 = vpow.pop %v618
    %v620 = vmul.f32 %v593, 1.442695
    %v621 = vpow.pop %v620
    %v622 = vmul.f32 %v594, 1.442695
    %v623 = vpow.pop %v622
    %v624 = vmul.f32 %v595, 1.442695
    %v625 = vpow.pop %v624
    %v626 = vmul.f32 %v596, 1.442695
    %v627 = vpow.pop %v626
    %v628 = vmul.f32 %v597, 1.442695
    %v629 = vpow.pop %v628
    %v630 = vadd.f32 %v599, 1.0
    %v631 = vadd.f32 %v601, 1.0
    %v632 = vadd.f32 %v603, 1.0
    %v633 = vadd.f32 %v605, 1.0
    %v634 = vadd.f32 %v607, 1.0
    %v635 = vadd.f32 %v609, 1.0
    %v636 = vadd.f32 %v611, 1.0
    %v637 = vadd.f32 %v613, 1.0
    %v638 = vadd.f32 %v615, 1.0
    %v639 = vadd.f32 %v617, 1.0
    %v640 = vadd.f32 %v619, 1.0
    %v641 = vadd.f32 %v621, 1.0
    %v642 = vadd.f32 %v623, 1.0
    %v643 = vadd.f32 %v625, 1.0
    %v644 = vadd.f32 %v627, 1.0
    %v645 = vadd.f32 %v629, 1.0
    %v646 = vrcp.pop %v630
    %v647 = vmul.f32 1.0, %v646
    %v648 = vrcp.pop %v631
    %v649 = vmul.f32 1.0, %v648
    %v650 = vrcp.pop %v632
    %v651 = vmul.f32 1.0, %v650
    %v652 = vrcp.pop %v633
    %v653 = vmul.f32 1.0, %v652
    %v654 = vrcp.pop %v634
    %v655 = vmul.f32 1.0, %v654
    %v656 = vrcp.pop %v635
    %v657 = vmul.f32 1.0, %v656
    %v658 = vrcp.pop %v636
    %v659 = vmul.f32 1.0, %v658
    %v660 = vrcp.pop %v637
    %v661 = vmul.f32 1.0, %v660
    %v662 = vrcp.pop %v638
    %v663 = vmul.f32 1.0, %v662
    %v664 = vrcp.pop %v639
    %v665 = vmul.f32 1.0, %v664
    %v666 = vrcp.pop %v640
    %v667 = vmul.f32 1.0, %v666
    %v668 = vrcp.pop %v641
    %v669 = vmul.f32 1.0, %v668
    %v670 = vrcp.pop %v642
    %v671 = vmul.f32 1.0, %v670
    %v672 = vrcp.pop %v643
    %v673 = vmul.f32 1.0, %v672
    %v674 = vrcp.pop %v644
    %v675 = vmul.f32 1.0, %v674
    %v676 = vrcp.pop %v645
    %v677 = vmul.f32 1.0, %v676
    %vm678 = vcmask 7168
    %679 = vst.msk [vmem:[%s7] sm:$0xff] %vm678, %v647
    %680 = vst.msk [vmem:[%s7 + $0x8] sm:$0xff] %vm678, %v649
    %681 = vst.msk [vmem:[%s7 + $0x10] sm:$0xff] %vm678, %v651
    %682 = vst.msk [vmem:[%s7 + $0x18] sm:$0xff] %vm678, %v653
    %683 = vst.msk [vmem:[%s7 + $0x20] sm:$0xff] %vm678, %v655
    %684 = vst.msk [vmem:[%s7 + $0x28] sm:$0xff] %vm678, %v657
    %685 = vst.msk [vmem:[%s7 + $0x30] sm:$0xff] %vm678, %v659
    %686 = vst.msk [vmem:[%s7 + $0x38] sm:$0xff] %vm678, %v661
    %687 = vst.msk [vmem:[%s7 + $0x40] sm:$0xff] %vm678, %v663
    %688 = vst.msk [vmem:[%s7 + $0x48] sm:$0xff] %vm678, %v665
    %689 = vst.msk [vmem:[%s7 + $0x50] sm:$0xff] %vm678, %v667
    %690 = vst.msk [vmem:[%s7 + $0x58] sm:$0xff] %vm678, %v669
    %691 = vst.msk [vmem:[%s7 + $0x60] sm:$0xff] %vm678, %v671
    %692 = vst.msk [vmem:[%s7 + $0x68] sm:$0xff] %vm678, %v673
    %693 = vst.msk [vmem:[%s7 + $0x70] sm:$0xff] %vm678, %v675
    %694 = vst.msk [vmem:[%s7 + $0x78] sm:$0xff] %vm678, %v677
    // Predicated region
    $region42: #{tpu_custom_call.1} parent=1 // pred_check
      _
    $region43: #{tpu_custom_call.1} parent=1 // pred_check_branch
      %696 = sbr.rel (0) target = $region45
    $region44: #{tpu_custom_call.1} parent=1 // pred_region
      _
    $region45: #{tpu_custom_call.1} parent=1 // pred_fallthru
      _
    // Predicated region
    $region46: #{tpu_custom_call.1} parent=1 // pred_check
      _
    $region47: #{tpu_custom_call.1} parent=1 // pred_check_branch
      %698 = sbr.rel (0) target = $region49
    $region48: #{tpu_custom_call.1} parent=1 // pred_region
      _
    $region49: #{tpu_custom_call.1} parent=1 // pred_fallthru
      _
    %699 = vsyncpa [#allocation4], 1
    %700 = vsyncpa [#allocation6], 1

// kernel: tpu_custom_call.1
$region0: #{tpu_custom_call.1}
  #allocation0 [shape = 'u32[]', space=smem, size = 0x4, offset = 0x4, fixed_abs, tag = 'smem constant byte address 0x4 - core index']
  #allocation1 [shape = 'u32[144,128]{1,0:T(1,128)}', space=vmem, size = 0x12000, scoped, tag = 'internal scratch']
  #allocation2 [shape = 'f32[1]{0:T(128)S(6)}', space=smem, size = 0x200, scoped, tag = 'scoped memory for tpu_custom_call.1']
  %s0 = inlined_call_operand.hbm [shape: bf16[128,128], index: 0, kind: input, shape index: {}]
  %s1 = inlined_call_operand.hbm [shape: bf16[128,128], index: 1, kind: input, shape index: {}]
  %s2 = inlined_call_operand.vmem [shape: f32[1,128], index: 2, kind: input, shape index: {}]
  %s3 = inlined_call_operand.hbm [shape: bf16[128,128], index: 3, kind: input, shape index: {}]
  %s4 = inlined_call_operand.vmem [shape: f32[1,128], index: 4, kind: input, shape index: {}]
  %s5 = inlined_call_operand.vmem [shape: f32[1,128], index: 5, kind: input, shape index: {}]
  %s6 = inlined_call_operand.<no memory space> [shape: f32[1], index: 6, kind: input, shape index: {}]
  %s7 = inlined_call_operand.vmem [shape: f32[128,1], index: 7, kind: output, shape index: {}]
  %s8 = sld [smem:[#allocation0]]
  $region50: #{tpu_custom_call.1} parent=0
    _
  %s10 = ssub.s32 1, %s8
  %s11 = scalar_select 0, %s10, %s8
  %12 = sst [smem:[#allocation2]] %s6
  $region1: #{tpu_custom_call.1} parent=0
    #allocation3 [shape = 'u8[32768]{0}', space=vmem, size = 0x8000, scoped, tag = 'input window, operand 0, single buffered']
    #allocation4 [shape = 's32[1]{0}', space=sflag, size = 0x4, scoped, tag = 'scoped memory for tpu_custom_call.1']
    #allocation5 [shape = 'u8[32768]{0}', space=vmem, size = 0x8000, scoped, tag = 'input window, operand 1, single buffered']
    #allocation6 [shape = 's32[1]{0}', space=sflag, size = 0x4, scoped, tag = 'scoped memory for tpu_custom_call.1']
    #allocation7 [shape = 'u8[32768]{0}', space=vmem, size = 0x8000, scoped, tag = 'input window, operand 3, single buffered']
    %13 = vsyncpa [#allocation4], 0
    %14 = vsyncpa [#allocation6], 0
    // Predicated region
    $region2: #{tpu_custom_call.1} parent=1 // pred_check
      _
    $region3: #{tpu_custom_call.1} parent=1 // pred_check_branch
      %16 = sbr.rel (0) target = $region5
    $region4: #{tpu_custom_call.1} parent=1 // pred_region
      %s18 = ssub.s32 1024, 1024
      %19 = vsyncadd [#allocation4], %s18
      %s20 = sshll.u32 [#allocation3], 4
      %s21 = int_to_ptr.vmem [resolvable:$true] %s20
      %26 = dma.hbm_to_vmem [thread:$0]  %s0, 1024, %s21, [#allocation4], 64, 64, 4
    $region5: #{tpu_custom_call.1} parent=1 // pred_fallthru
      _
    // Predicated region
    $region6: #{tpu_custom_call.1} parent=1 // pred_check
      _
    $region7: #{tpu_custom_call.1} parent=1 // pred_check_branch
      %28 = sbr.rel (0) target = $region9
    $region8: #{tpu_custom_call.1} parent=1 // pred_region
      %s30 = ssub.s32 1024, 1024
      %31 = vsyncadd [#allocation6], %s30
      %s32 = sshll.u32 [#allocation5], 4
      %s33 = int_to_ptr.vmem [resolvable:$true] %s32
      %38 = dma.hbm_to_vmem [thread:$0]  %s1, 1024, %s33, [#allocation6], 64, 64, 4
    $region9: #{tpu_custom_call.1} parent=1 // pred_fallthru
      _
    // Predicated region
    $region10: #{tpu_custom_call.1} parent=1 // pred_check
      _
    $region11: #{tpu_custom_call.1} parent=1 // pred_check_branch
      %40 = sbr.rel (0) target = $region13
    $region12: #{tpu_custom_call.1} parent=1 // pred_region
      _
    $region13: #{tpu_custom_call.1} parent=1 // pred_fallthru
      _
    // Predicated region
    $region14: #{tpu_custom_call.1} parent=1 // pred_check
      _
    $region15: #{tpu_custom_call.1} parent=1 // pred_check_branch
      %42 = sbr.rel (0) target = $region17
    $region16: #{tpu_custom_call.1} parent=1 // pred_region
      %s44 = ssub.s32 1024, 1024
      %45 = vsyncadd [#allocation6], %s44
      %s46 = sshll.u32 [#allocation7], 4
      %s47 = int_to_ptr.vmem [resolvable:$true] %s46
      %52 = dma.hbm_to_vmem [thread:$0]  %s3, 1024, %s47, [#allocation6], 64, 64, 4
    $region17: #{tpu_custom_call.1} parent=1 // pred_fallthru
      _
    // Predicated region
    $region18: #{tpu_custom_call.1} parent=1 // pred_check
      _
    $region19: #{tpu_custom_call.1} parent=1 // pred_check_branch
      %54 = sbr.rel (0) target = $region21
    $region20: #{tpu_custom_call.1} parent=1 // pred_region
      _
    $region21: #{tpu_custom_call.1} parent=1 // pred_fallthru
      _
    // Predicated region
    $region22: #{tpu_custom_call.1} parent=1 // pred_check
      _
    $region23: #{tpu_custom_call.1} parent=1 // pred_check_branch
      %56 = sbr.rel (0) target = $region25
    $region24: #{tpu_custom_call.1} parent=1 // pred_region
      _
    $region25: #{tpu_custom_call.1} parent=1 // pred_fallthru
      _
    // Predicated region
    $region26: #{tpu_custom_call.1} parent=1 // pred_check
      _
    $region27: #{tpu_custom_call.1} parent=1 // pred_check_branch
      %58 = sbr.rel (0) target = $region29
    $region28: #{tpu_custom_call.1} parent=1 // pred_region
      _
    $region29: #{tpu_custom_call.1} parent=1 // pred_fallthru
      _
    // Predicated region
    $region30: #{tpu_custom_call.1} parent=1 // pred_check
      _
    $region31: #{tpu_custom_call.1} parent=1 // pred_check_branch
      %60 = sbr.rel (0) target = $region33
    $region32: #{tpu_custom_call.1} parent=1 // pred_region
      %61 = dma.done [#allocation4], 1024
    $region33: #{tpu_custom_call.1} parent=1 // pred_fallthru
      _
    // Predicated region
    $region34: #{tpu_custom_call.1} parent=1 // pred_check
      _
    $region35: #{tpu_custom_call.1} parent=1 // pred_check_branch
      %63 = sbr.rel (0) target = $region37
    $region36: #{tpu_custom_call.1} parent=1 // pred_region
      %64 = dma.done [#allocation6], 1024
    $region37: #{tpu_custom_call.1} parent=1 // pred_fallthru
      _
    // Predicated region
    $region38: #{tpu_custom_call.1} parent=1 // pred_check
      _
    $region39: #{tpu_custom_call.1} parent=1 // pred_check_branch
      %66 = sbr.rel (0) target = $region41
    $region40: #{tpu_custom_call.1} parent=1 // pred_region
      %67 = dma.done [#allocation6], 1024
    $region41: #{tpu_custom_call.1} parent=1 // pred_fallthru
      _
    %v69 = vld [vmem:[#allocation3] sm:$0xf]
    %v70 = vld [vmem:[#allocation3 + $0x4] sm:$0xf]
    %v71 = vld [vmem:[#allocation3 + $0x8] sm:$0xf]
    %v72 = vld [vmem:[#allocation3 + $0xc] sm:$0xf]
    %v73 = vld [vmem:[#allocation3 + $0x10] sm:$0xf]
    %v74 = vld [vmem:[#allocation3 + $0x14] sm:$0xf]
    %v75 = vld [vmem:[#allocation3 + $0x18] sm:$0xf]
    %v76 = vld [vmem:[#allocation3 + $0x1c] sm:$0xf]
    %v77 = vld [vmem:[#allocation3 + $0x20] sm:$0xf]
    %v78 = vld [vmem:[#allocation3 + $0x24] sm:$0xf]
    %v79 = vld [vmem:[#allocation3 + $0x28] sm:$0xf]
    %v80 = vld [vmem:[#allocation3 + $0x2c] sm:$0xf]
    %v81 = vld [vmem:[#allocation3 + $0x30] sm:$0xf]
    %v82 = vld [vmem:[#allocation3 + $0x34] sm:$0xf]
    %v83 = vld [vmem:[#allocation3 + $0x38] sm:$0xf]
    %v84 = vld [vmem:[#allocation3 + $0x3c] sm:$0xf]
    %v85 = vld [vmem:[#allocation5] sm:$0xf]
    %v86 = vld [vmem:[#allocation5 + $0x4] sm:$0xf]
    %v87 = vld [vmem:[#allocation5 + $0x8] sm:$0xf]
    %v88 = vld [vmem:[#allocation5 + $0xc] sm:$0xf]
    %v89 = vld [vmem:[#allocation5 + $0x10] sm:$0xf]
    %v90 = vld [vmem:[#allocation5 + $0x14] sm:$0xf]
    %v91 = vld [vmem:[#allocation5 + $0x18] sm:$0xf]
    %v92 = vld [vmem:[#allocation5 + $0x1c] sm:$0xf]
    %v93 = vld [vmem:[#allocation5 + $0x20] sm:$0xf]
    %v94 = vld [vmem:[#allocation5 + $0x24] sm:$0xf]
    %v95 = vld [vmem:[#allocation5 + $0x28] sm:$0xf]
    %v96 = vld [vmem:[#allocation5 + $0x2c] sm:$0xf]
    %v97 = vld [vmem:[#allocation5 + $0x30] sm:$0xf]
    %v98 = vld [vmem:[#allocation5 + $0x34] sm:$0xf]
    %v99 = vld [vmem:[#allocation5 + $0x38] sm:$0xf]
    %v100 = vld [vmem:[#allocation5 + $0x3c] sm:$0xf]
    %v101 = vld [vmem:[%s2] sm:$0x1]
    %v103 = vlaneseq
    %v104 = vshrl.u32 %v103, 7
    %v105 = vsub.s32 0, %v104
    %v106 = vrot.slane %v101, %v105
    %v124 = vunpack.c.l.b16 %v69
    %v125 = vunpack.c.l.b16 %v70
    %v126 = vunpack.c.l.b16 %v71
    %v127 = vunpack.c.l.b16 %v72
    %v128 = vunpack.c.l.b16 %v73
    %v129 = vunpack.c.l.b16 %v74
    %v130 = vunpack.c.l.b16 %v75
    %v131 = vunpack.c.l.b16 %v76
    %v132 = vunpack.c.l.b16 %v77
    %v133 = vunpack.c.l.b16 %v78
    %v134 = vunpack.c.l.b16 %v79
    %v135 = vunpack.c.l.b16 %v80
    %v136 = vunpack.c.l.b16 %v81
    %v137 = vunpack.c.l.b16 %v82
    %v138 = vunpack.c.l.b16 %v83
    %v139 = vunpack.c.l.b16 %v84
    %v140 = vpack.c.b16 %v125, %v124
    %v141 = vpack.c.b16 %v127, %v126
    %v142 = vpack.c.b16 %v129, %v128
    %v143 = vpack.c.b16 %v131, %v130
    %v144 = vpack.c.b16 %v133, %v132
    %v145 = vpack.c.b16 %v135, %v134
    %v146 = vpack.c.b16 %v137, %v136
    %v147 = vpack.c.b16 %v139, %v138
    %v172 = vunpack.c.l.b16 %v85
    %v173 = vunpack.c.l.b16 %v86
    %v174 = vunpack.c.l.b16 %v87
    %v175 = vunpack.c.l.b16 %v88
    %v176 = vunpack.c.l.b16 %v89
    %v177 = vunpack.c.l.b16 %v90
    %v178 = vunpack.c.l.b16 %v91
    %v179 = vunpack.c.l.b16 %v92
    %v180 = vunpack.c.l.b16 %v93
    %v181 = vunpack.c.l.b16 %v94
    %v182 = vunpack.c.l.b16 %v95
    %v183 = vunpack.c.l.b16 %v96
    %v184 = vunpack.c.l.b16 %v97
    %v185 = vunpack.c.l.b16 %v98
    %v186 = vunpack.c.l.b16 %v99
    %v187 = vunpack.c.l.b16 %v100
    %v188 = vpack.c.b16 %v173, %v172
    %v189 = vpack.c.b16 %v175, %v174
    %v190 = vpack.c.b16 %v177, %v176
    %v191 = vpack.c.b16 %v179, %v178
    %v192 = vpack.c.b16 %v181, %v180
    %v193 = vpack.c.b16 %v183, %v182
    %v194 = vpack.c.b16 %v185, %v184
    %v195 = vpack.c.b16 %v187, %v186
    %204 = vmatprep.subr.bf16.mxu0 0
    %205 = vmatpush1.bf16.msra.mxu0 %v188
    %206 = vmatprep.subr.bf16.mxu0 0
    %207 = vmatpush1.bf16.msra.mxu0 %v189
    %208 = vmatprep.subr.bf16.mxu0 0
    %209 = vmatpush1.bf16.msra.mxu0 %v190
    %210 = vmatprep.subr.bf16.mxu0 0
    %211 = vmatpush1.bf16.msra.mxu0 %v191
    %212 = vmatprep.subr.bf16.mxu0 0
    %213 = vmatpush1.bf16.msra.mxu0 %v192
    %214 = vmatprep.subr.bf16.mxu0 0
    %215 = vmatpush1.bf16.msra.mxu0 %v193
    %216 = vmatprep.subr.bf16.mxu0 0
    %217 = vmatpush1.bf16.msra.mxu0 %v194
    %218 = vmatprep.subr.bf16.mxu0 0
    %219 = vmatpush1.bf16.msra.mxu0 %v195
    %220 = vmatprep.subr.bf16.mxu0 0
    %221 = vmatpush1.bf16.msra.mxu0 0
    %222 = vmatprep.subr.bf16.mxu0 0
    %223 = vmatpush1.bf16.msra.mxu0 0
    %224 = vmatprep.subr.bf16.mxu0 0
    %225 = vmatpush1.bf16.msra.mxu0 0
    %226 = vmatprep.subr.bf16.mxu0 0
    %227 = vmatpush1.bf16.msra.mxu0 0
    %228 = vmatprep.subr.bf16.mxu0 0
    %229 = vmatpush1.bf16.msra.mxu0 0
    %230 = vmatprep.subr.bf16.mxu0 0
    %231 = vmatpush1.bf16.msra.mxu0 0
    %232 = vmatprep.subr.bf16.mxu0 0
    %233 = vmatpush1.bf16.msra.mxu0 0
    %234 = vmatprep.subr.bf16.mxu0 0
    %235 = vmatpush1.bf16.msra.mxu0 0
    %236 = vmatprep.mubr.bf16.mxu0 0
    %237 = vmatmul.mubr.bf16.gmra.mrb[0].mxu0 %v140
    %v238 = vpop.f32.mrb[0].mxu0
    %v239 = vadd.f32 %v106, %v238
    %v240 = vpop.f32.mrb[0].mxu0
    %v241 = vpop.f32.mrb[0].mxu0
    %v242 = vadd.f32 %v106, %v241
    %v243 = vpop.f32.mrb[0].mxu0
    %244 = vmatprep.mubr.bf16.mxu0 0
    %245 = vmatmul.mubr.bf16.gmra.mrb[0].mxu0 %v141
    %v246 = vpop.f32.mrb[0].mxu0
    %v247 = vadd.f32 %v106, %v246
    %v248 = vpop.f32.mrb[0].mxu0
    %v249 = vpop.f32.mrb[0].mxu0
    %v250 = vadd.f32 %v106, %v249
    %v251 = vpop.f32.mrb[0].mxu0
    %252 = vmatprep.mubr.bf16.mxu0 0
    %253 = vmatmul.mubr.bf16.gmra.mrb[0].mxu0 %v142
    %v254 = vpop.f32.mrb[0].mxu0
    %v255 = vadd.f32 %v106, %v254
    %v256 = vpop.f32.mrb[0].mxu0
    %v257 = vpop.f32.mrb[0].mxu0
    %v258 = vadd.f32 %v106, %v257
    %v259 = vpop.f32.mrb[0].mxu0
    %260 = vmatprep.mubr.bf16.mxu0 0
    %261 = vmatmul.mubr.bf16.gmra.mrb[0].mxu0 %v143
    %v262 = vpop.f32.mrb[0].mxu0
    %v263 = vadd.f32 %v106, %v262
    %v264 = vpop.f32.mrb[0].mxu0
    %v265 = vpop.f32.mrb[0].mxu0
    %v266 = vadd.f32 %v106, %v265
    %v267 = vpop.f32.mrb[0].mxu0
    %268 = vmatprep.mubr.bf16.mxu0 0
    %269 = vmatmul.mubr.bf16.gmra.mrb[0].mxu0 %v144
    %v270 = vpop.f32.mrb[0].mxu0
    %v271 = vadd.f32 %v106, %v270
    %v272 = vpop.f32.mrb[0].mxu0
    %v273 = vpop.f32.mrb[0].mxu0
    %v274 = vadd.f32 %v106, %v273
    %v275 = vpop.f32.mrb[0].mxu0
    %276 = vmatprep.mubr.bf16.mxu0 0
    %277 = vmatmul.mubr.bf16.gmra.mrb[0].mxu0 %v145
    %v278 = vpop.f32.mrb[0].mxu0
    %v279 = vadd.f32 %v106, %v278
    %v280 = vpop.f32.mrb[0].mxu0
    %v281 = vpop.f32.mrb[0].mxu0
    %v282 = vadd.f32 %v106, %v281
    %v283 = vpop.f32.mrb[0].mxu0
    %284 = vmatprep.mubr.bf16.mxu0 0
    %285 = vmatmul.mubr.bf16.gmra.mrb[0].mxu0 %v146
    %v286 = vpop.f32.mrb[0].mxu0
    %v287 = vadd.f32 %v106, %v286
    %v288 = vpop.f32.mrb[0].mxu0
    %v289 = vpop.f32.mrb[0].mxu0
    %v290 = vadd.f32 %v106, %v289
    %v291 = vpop.f32.mrb[0].mxu0
    %292 = vmatprep.mubr.bf16.mxu0 0
    %293 = vmatmul.mubr.bf16.gmra.mrb[0].mxu0 %v147
    %v294 = vpop.f32.mrb[0].mxu0
    %v295 = vadd.f32 %v106, %v294
    %v296 = vpop.f32.mrb[0].mxu0
    %v297 = vpop.f32.mrb[0].mxu0
    %v298 = vadd.f32 %v106, %v297
    %v299 = vpop.f32.mrb[0].mxu0
    %300 = vdwg.mxu0
    %v301 = vmax.f32 %v239, 0.0
    %v302 = vmax.f32 %v242, 0.0
    %v303 = vmax.f32 %v247, 0.0
    %v304 = vmax.f32 %v250, 0.0
    %v305 = vmax.f32 %v255, 0.0
    %v306 = vmax.f32 %v258, 0.0
    %v307 = vmax.f32 %v263, 0.0
    %v308 = vmax.f32 %v266, 0.0
    %v309 = vmax.f32 %v271, 0.0
    %v310 = vmax.f32 %v274, 0.0
    %v311 = vmax.f32 %v279, 0.0
    %v312 = vmax.f32 %v282, 0.0
    %v313 = vmax.f32 %v287, 0.0
    %v314 = vmax.f32 %v290, 0.0
    %v315 = vmax.f32 %v295, 0.0
    %v316 = vmax.f32 %v298, 0.0
    %v317 = vld [vmem:[#allocation7] sm:$0xf]
    %v318 = vld [vmem:[#allocation7 + $0x4] sm:$0xf]
    %v319 = vld [vmem:[#allocation7 + $0x8] sm:$0xf]
    %v320 = vld [vmem:[#allocation7 + $0xc] sm:$0xf]
    %v321 = vld [vmem:[#allocation7 + $0x10] sm:$0xf]
    %v322 = vld [vmem:[#allocation7 + $0x14] sm:$0xf]
    %v323 = vld [vmem:[#allocation7 + $0x18] sm:$0xf]
    %v324 = vld [vmem:[#allocation7 + $0x1c] sm:$0xf]
    %v325 = vld [vmem:[#allocation7 + $0x20] sm:$0xf]
    %v326 = vld [vmem:[#allocation7 + $0x24] sm:$0xf]
    %v327 = vld [vmem:[#allocation7 + $0x28] sm:$0xf]
    %v328 = vld [vmem:[#allocation7 + $0x2c] sm:$0xf]
    %v329 = vld [vmem:[#allocation7 + $0x30] sm:$0xf]
    %v330 = vld [vmem:[#allocation7 + $0x34] sm:$0xf]
    %v331 = vld [vmem:[#allocation7 + $0x38] sm:$0xf]
    %v332 = vld [vmem:[#allocation7 + $0x3c] sm:$0xf]
    %v333 = vpack.c.bf16 %v302, %v301
    %v334 = vpack.c.bf16 %v304, %v303
    %v335 = vpack.c.bf16 %v306, %v305
    %v336 = vpack.c.bf16 %v308, %v307
    %v337 = vpack.c.bf16 %v310, %v309
    %v338 = vpack.c.bf16 %v312, %v311
    %v339 = vpack.c.bf16 %v314, %v313
    %v340 = vpack.c.bf16 %v316, %v315
    %v341 = vld [vmem:[%s4] sm:$0x1]
    %v343 = vlaneseq
    %v344 = vshrl.u32 %v343, 7
    %v345 = vsub.s32 0, %v344
    %v346 = vrot.slane %v341, %v345
    %v364 = vunpack.c.l.b16 %v317
    %v365 = vunpack.c.l.b16 %v318
    %v366 = vunpack.c.l.b16 %v319
    %v367 = vunpack.c.l.b16 %v320
    %v368 = vunpack.c.l.b16 %v321
    %v369 = vunpack.c.l.b16 %v322
    %v370 = vunpack.c.l.b16 %v323
    %v371 = vunpack.c.l.b16 %v324
    %v372 = vunpack.c.l.b16 %v325
    %v373 = vunpack.c.l.b16 %v326
    %v374 = vunpack.c.l.b16 %v327
    %v375 = vunpack.c.l.b16 %v328
    %v376 = vunpack.c.l.b16 %v329
    %v377 = vunpack.c.l.b16 %v330
    %v378 = vunpack.c.l.b16 %v331
    %v379 = vunpack.c.l.b16 %v332
    %v380 = vpack.c.b16 %v365, %v364
    %v381 = vpack.c.b16 %v367, %v366
    %v382 = vpack.c.b16 %v369, %v368
    %v383 = vpack.c.b16 %v371, %v370
    %v384 = vpack.c.b16 %v373, %v372
    %v385 = vpack.c.b16 %v375, %v374
    %v386 = vpack.c.b16 %v377, %v376
    %v387 = vpack.c.b16 %v379, %v378
    %396 = vmatprep.subr.bf16.mxu0 0
    %397 = vmatpush1.bf16.msra.mxu0 %v380
    %398 = vmatprep.subr.bf16.mxu0 0
    %399 = vmatpush1.bf16.msra.mxu0 %v381
    %400 = vmatprep.subr.bf16.mxu0 0
    %401 = vmatpush1.bf16.msra.mxu0 %v382
    %402 = vmatprep.subr.bf16.mxu0 0
    %403 = vmatpush1.bf16.msra.mxu0 %v383
    %404 = vmatprep.subr.bf16.mxu0 0
    %405 = vmatpush1.bf16.msra.mxu0 %v384
    %406 = vmatprep.subr.bf16.mxu0 0
    %407 = vmatpush1.bf16.msra.mxu0 %v385
    %408 = vmatprep.subr.bf16.mxu0 0
    %409 = vmatpush1.bf16.msra.mxu0 %v386
    %410 = vmatprep.subr.bf16.mxu0 0
    %411 = vmatpush1.bf16.msra.mxu0 %v387
    %412 = vmatprep.subr.bf16.mxu0 0
    %413 = vmatpush1.bf16.msra.mxu0 0
    %414 = vmatprep.subr.bf16.mxu0 0
    %415 = vmatpush1.bf16.msra.mxu0 0
    %416 = vmatprep.subr.bf16.mxu0 0
    %417 = vmatpush1.bf16.msra.mxu0 0
    %418 = vmatprep.subr.bf16.mxu0 0
    %419 = vmatpush1.bf16.msra.mxu0 0
    %420 = vmatprep.subr.bf16.mxu0 0
    %421 = vmatpush1.bf16.msra.mxu0 0
    %422 = vmatprep.subr.bf16.mxu0 0
    %423 = vmatpush1.bf16.msra.mxu0 0
    %424 = vmatprep.subr.bf16.mxu0 0
    %425 = vmatpush1.bf16.msra.mxu0 0
    %426 = vmatprep.subr.bf16.mxu0 0
    %427 = vmatpush1.bf16.msra.mxu0 0
    %428 = vmatprep.mubr.bf16.mxu0 0
    %429 = vmatmul.mubr.bf16.gmra.mrb[0].mxu0 %v333
    %v430 = vpop.f32.mrb[0].mxu0
    %v431 = vadd.f32 %v346, %v430
    %v432 = vpop.f32.mrb[0].mxu0
    %v433 = vpop.f32.mrb[0].mxu0
    %v434 = vadd.f32 %v346, %v433
    %v435 = vpop.f32.mrb[0].mxu0
    %436 = vmatprep.mubr.bf16.mxu0 0
    %437 = vmatmul.mubr.bf16.gmra.mrb[0].mxu0 %v334
    %v438 = vpop.f32.mrb[0].mxu0
    %v439 = vadd.f32 %v346, %v438
    %v440 = vpop.f32.mrb[0].mxu0
    %v441 = vpop.f32.mrb[0].mxu0
    %v442 = vadd.f32 %v346, %v441
    %v443 = vpop.f32.mrb[0].mxu0
    %444 = vmatprep.mubr.bf16.mxu0 0
    %445 = vmatmul.mubr.bf16.gmra.mrb[0].mxu0 %v335
    %v446 = vpop.f32.mrb[0].mxu0
    %v447 = vadd.f32 %v346, %v446
    %v448 = vpop.f32.mrb[0].mxu0
    %v449 = vpop.f32.mrb[0].mxu0
    %v450 = vadd.f32 %v346, %v449
    %v451 = vpop.f32.mrb[0].mxu0
    %452 = vmatprep.mubr.bf16.mxu0 0
    %453 = vmatmul.mubr.bf16.gmra.mrb[0].mxu0 %v336
    %v454 = vpop.f32.mrb[0].mxu0
    %v455 = vadd.f32 %v346, %v454
    %v456 = vpop.f32.mrb[0].mxu0
    %v457 = vpop.f32.mrb[0].mxu0
    %v458 = vadd.f32 %v346, %v457
    %v459 = vpop.f32.mrb[0].mxu0
    %460 = vmatprep.mubr.bf16.mxu0 0
    %461 = vmatmul.mubr.bf16.gmra.mrb[0].mxu0 %v337
    %v462 = vpop.f32.mrb[0].mxu0
    %v463 = vadd.f32 %v346, %v462
    %v464 = vpop.f32.mrb[0].mxu0
    %v465 = vpop.f32.mrb[0].mxu0
    %v466 = vadd.f32 %v346, %v465
    %v467 = vpop.f32.mrb[0].mxu0
    %468 = vmatprep.mubr.bf16.mxu0 0
    %469 = vmatmul.mubr.bf16.gmra.mrb[0].mxu0 %v338
    %v470 = vpop.f32.mrb[0].mxu0
    %v471 = vadd.f32 %v346, %v470
    %v472 = vpop.f32.mrb[0].mxu0
    %v473 = vpop.f32.mrb[0].mxu0
    %v474 = vadd.f32 %v346, %v473
    %v475 = vpop.f32.mrb[0].mxu0
    %476 = vmatprep.mubr.bf16.mxu0 0
    %477 = vmatmul.mubr.bf16.gmra.mrb[0].mxu0 %v339
    %v478 = vpop.f32.mrb[0].mxu0
    %v479 = vadd.f32 %v346, %v478
    %v480 = vpop.f32.mrb[0].mxu0
    %v481 = vpop.f32.mrb[0].mxu0
    %v482 = vadd.f32 %v346, %v481
    %v483 = vpop.f32.mrb[0].mxu0
    %484 = vmatprep.mubr.bf16.mxu0 0
    %485 = vmatmul.mubr.bf16.gmra.mrb[0].mxu0 %v340
    %v486 = vpop.f32.mrb[0].mxu0
    %v487 = vadd.f32 %v346, %v486
    %v488 = vpop.f32.mrb[0].mxu0
    %v489 = vpop.f32.mrb[0].mxu0
    %v490 = vadd.f32 %v346, %v489
    %v491 = vpop.f32.mrb[0].mxu0
    %492 = vdwg.mxu0
    %v493 = vmax.f32 %v431, 0.0
    %v494 = vmax.f32 %v434, 0.0
    %v495 = vmax.f32 %v439, 0.0
    %v496 = vmax.f32 %v442, 0.0
    %v497 = vmax.f32 %v447, 0.0
    %v498 = vmax.f32 %v450, 0.0
    %v499 = vmax.f32 %v455, 0.0
    %v500 = vmax.f32 %v458, 0.0
    %v501 = vmax.f32 %v463, 0.0
    %v502 = vmax.f32 %v466, 0.0
    %v503 = vmax.f32 %v471, 0.0
    %v504 = vmax.f32 %v474, 0.0
    %v505 = vmax.f32 %v479, 0.0
    %v506 = vmax.f32 %v482, 0.0
    %v507 = vmax.f32 %v487, 0.0
    %v508 = vmax.f32 %v490, 0.0
    %v509 = vld [vmem:[%s5] sm:$0x1]
    %v511 = vlaneseq
    %v512 = vshrl.u32 %v511, 7
    %v513 = vsub.s32 0, %v512
    %v514 = vrot.slane %v509, %v513
    %v516 = vmul.f32 %v493, %v514
    %v517 = vmul.f32 %v494, %v514
    %v518 = vmul.f32 %v495, %v514
    %v519 = vmul.f32 %v496, %v514
    %v520 = vmul.f32 %v497, %v514
    %v521 = vmul.f32 %v498, %v514
    %v522 = vmul.f32 %v499, %v514
    %v523 = vmul.f32 %v500, %v514
    %v524 = vmul.f32 %v501, %v514
    %v525 = vmul.f32 %v502, %v514
    %v526 = vmul.f32 %v503, %v514
    %v527 = vmul.f32 %v504, %v514
    %v528 = vmul.f32 %v505, %v514
    %v529 = vmul.f32 %v506, %v514
    %v530 = vmul.f32 %v507, %v514
    %v531 = vmul.f32 %v508, %v514
    %532 = vadd.xlane.f32.xlu0 %v516
    %v533 = vpop.xlane.xlu0 %532
    %534 = vadd.xlane.f32.xlu0 %v517
    %v535 = vpop.xlane.xlu0 %534
    %536 = vadd.xlane.f32.xlu0 %v518
    %v537 = vpop.xlane.xlu0 %536
    %538 = vadd.xlane.f32.xlu0 %v519
    %v539 = vpop.xlane.xlu0 %538
    %540 = vadd.xlane.f32.xlu0 %v520
    %v541 = vpop.xlane.xlu0 %540
    %542 = vadd.xlane.f32.xlu0 %v521
    %v543 = vpop.xlane.xlu0 %542
    %544 = vadd.xlane.f32.xlu0 %v522
    %v545 = vpop.xlane.xlu0 %544
    %546 = vadd.xlane.f32.xlu0 %v523
    %v547 = vpop.xlane.xlu0 %546
    %548 = vadd.xlane.f32.xlu0 %v524
    %v549 = vpop.xlane.xlu0 %548
    %550 = vadd.xlane.f32.xlu0 %v525
    %v551 = vpop.xlane.xlu0 %550
    %552 = vadd.xlane.f32.xlu0 %v526
    %v553 = vpop.xlane.xlu0 %552
    %554 = vadd.xlane.f32.xlu0 %v527
    %v555 = vpop.xlane.xlu0 %554
    %556 = vadd.xlane.f32.xlu0 %v528
    %v557 = vpop.xlane.xlu0 %556
    %558 = vadd.xlane.f32.xlu0 %v529
    %v559 = vpop.xlane.xlu0 %558
    %560 = vadd.xlane.f32.xlu0 %v530
    %v561 = vpop.xlane.xlu0 %560
    %562 = vadd.xlane.f32.xlu0 %v531
    %v563 = vpop.xlane.xlu0 %562
    %s564 = sld [smem:[#allocation2]]
    %v565 = vstv %s564
    %v566 = vadd.f32 %v533, %v565
    %v567 = vadd.f32 %v535, %v565
    %v568 = vadd.f32 %v537, %v565
    %v569 = vadd.f32 %v539, %v565
    %v570 = vadd.f32 %v541, %v565
    %v571 = vadd.f32 %v543, %v565
    %v572 = vadd.f32 %v545, %v565
    %v573 = vadd.f32 %v547, %v565
    %v574 = vadd.f32 %v549, %v565
    %v575 = vadd.f32 %v551, %v565
    %v576 = vadd.f32 %v553, %v565
    %v577 = vadd.f32 %v555, %v565
    %v578 = vadd.f32 %v557, %v565
    %v579 = vadd.f32 %v559, %v565
    %v580 = vadd.f32 %v561, %v565
    %v581 = vadd.f32 %v563, %v565
    %v582 = vxor.u32 %v566, 2147483648
    %v583 = vxor.u32 %v567, 2147483648
    %v584 = vxor.u32 %v568, 2147483648
    %v585 = vxor.u32 %v569, 2147483648
    %v586 = vxor.u32 %v570, 2147483648
    %v587 = vxor.u32 %v571, 2147483648
    %v588 = vxor.u32 %v572, 2147483648
    %v589 = vxor.u32 %v573, 2147483648
    %v590 = vxor.u32 %v574, 2147483648
    %v591 = vxor.u32 %v575, 2147483648
    %v592 = vxor.u32 %v576, 2147483648
    %v593 = vxor.u32 %v577, 2147483648
    %v594 = vxor.u32 %v578, 2147483648
    %v595 = vxor.u32 %v579, 2147483648
    %v596 = vxor.u32 %v580, 2147483648
    %v597 = vxor.u32 %v581, 2147483648
    %v598 = vmul.f32 %v582, 1.442695
    %v599 = vpow.pop %v598
    %v600 = vmul.f32 %v583, 1.442695
    %v601 = vpow.pop %v600
    %v602 = vmul.f32 %v584, 1.442695
    %v603 = vpow.pop %v602
    %v604 = vmul.f32 %v585, 1.442695
    %v605 = vpow.pop %v604
    %v606 = vmul.f32 %v586, 1.442695
    %v607 = vpow.pop %v606
    %v608 = vmul.f32 %v587, 1.442695
    %v609 = vpow.pop %v608
    %v610 = vmul.f32 %v588, 1.442695
    %v611 = vpow.pop %v610
    %v612 = vmul.f32 %v589, 1.442695
    %v613 = vpow.pop %v612
    %v614 = vmul.f32 %v590, 1.442695
    %v615 = vpow.pop %v614
    %v616 = vmul.f32 %v591, 1.442695
    %v617 = vpow.pop %v616
    %v618 = vmul.f32 %v592, 1.442695
    %v619 = vpow.pop %v618
    %v620 = vmul.f32 %v593, 1.442695
    %v621 = vpow.pop %v620
    %v622 = vmul.f32 %v594, 1.442695
    %v623 = vpow.pop %v622
    %v624 = vmul.f32 %v595, 1.442695
    %v625 = vpow.pop %v624
    %v626 = vmul.f32 %v596, 1.442695
    %v627 = vpow.pop %v626
    %v628 = vmul.f32 %v597, 1.442695
    %v629 = vpow.pop %v628
    %v630 = vadd.f32 %v599, 1.0
    %v631 = vadd.f32 %v601, 1.0
    %v632 = vadd.f32 %v603, 1.0
    %v633 = vadd.f32 %v605, 1.0
    %v634 = vadd.f32 %v607, 1.0
    %v635 = vadd.f32 %v609, 1.0
    %v636 = vadd.f32 %v611, 1.0
    %v637 = vadd.f32 %v613, 1.0
    %v638 = vadd.f32 %v615, 1.0
    %v639 = vadd.f32 %v617, 1.0
    %v640 = vadd.f32 %v619, 1.0
    %v641 = vadd.f32 %v621, 1.0
    %v642 = vadd.f32 %v623, 1.0
    %v643 = vadd.f32 %v625, 1.0
    %v644 = vadd.f32 %v627, 1.0
    %v645 = vadd.f32 %v629, 1.0
    %v646 = vrcp.pop %v630
    %v647 = vmul.f32 1.0, %v646
    %v648 = vrcp.pop %v631
    %v649 = vmul.f32 1.0, %v648
    %v650 = vrcp.pop %v632
    %v651 = vmul.f32 1.0, %v650
    %v652 = vrcp.pop %v633
    %v653 = vmul.f32 1.0, %v652
    %v654 = vrcp.pop %v634
    %v655 = vmul.f32 1.0, %v654
    %v656 = vrcp.pop %v635
    %v657 = vmul.f32 1.0, %v656
    %v658 = vrcp.pop %v636
    %v659 = vmul.f32 1.0, %v658
    %v660 = vrcp.pop %v637
    %v661 = vmul.f32 1.0, %v660
    %v662 = vrcp.pop %v638
    %v663 = vmul.f32 1.0, %v662
    %v664 = vrcp.pop %v639
    %v665 = vmul.f32 1.0, %v664
    %v666 = vrcp.pop %v640
    %v667 = vmul.f32 1.0, %v666
    %v668 = vrcp.pop %v641
    %v669 = vmul.f32 1.0, %v668
    %v670 = vrcp.pop %v642
    %v671 = vmul.f32 1.0, %v670
    %v672 = vrcp.pop %v643
    %v673 = vmul.f32 1.0, %v672
    %v674 = vrcp.pop %v644
    %v675 = vmul.f32 1.0, %v674
    %v676 = vrcp.pop %v645
    %v677 = vmul.f32 1.0, %v676
    %vm678 = vcmask 7168
    %679 = vst.msk [vmem:[%s7] sm:$0xff] %vm678, %v647
    %680 = vst.msk [vmem:[%s7 + $0x8] sm:$0xff] %vm678, %v649
    %681 = vst.msk [vmem:[%s7 + $0x10] sm:$0xff] %vm678, %v651
    %682 = vst.msk [vmem:[%s7 + $0x18] sm:$0xff] %vm678, %v653
    %683 = vst.msk [vmem:[%s7 + $0x20] sm:$0xff] %vm678, %v655
    %684 = vst.msk [vmem:[%s7 + $0x28] sm:$0xff] %vm678, %v657
    %685 = vst.msk [vmem:[%s7 + $0x30] sm:$0xff] %vm678, %v659
    %686 = vst.msk [vmem:[%s7 + $0x38] sm:$0xff] %vm678, %v661
    %687 = vst.msk [vmem:[%s7 + $0x40] sm:$0xff] %vm678, %v663
    %688 = vst.msk [vmem:[%s7 + $0x48] sm:$0xff] %vm678, %v665
    %689 = vst.msk [vmem:[%s7 + $0x50] sm:$0xff] %vm678, %v667
    %690 = vst.msk [vmem:[%s7 + $0x58] sm:$0xff] %vm678, %v669
    %691 = vst.msk [vmem:[%s7 + $0x60] sm:$0xff] %vm678, %v671
    %692 = vst.msk [vmem:[%s7 + $0x68] sm:$0xff] %vm678, %v673
    %693 = vst.msk [vmem:[%s7 + $0x70] sm:$0xff] %vm678, %v675
    %694 = vst.msk [vmem:[%s7 + $0x78] sm:$0xff] %vm678, %v677
    // Predicated region
    $region42: #{tpu_custom_call.1} parent=1 // pred_check
      _
    $region43: #{tpu_custom_call.1} parent=1 // pred_check_branch
      %696 = sbr.rel (0) target = $region45
    $region44: #{tpu_custom_call.1} parent=1 // pred_region
      _
    $region45: #{tpu_custom_call.1} parent=1 // pred_fallthru
      _
    // Predicated region
    $region46: #{tpu_custom_call.1} parent=1 // pred_check
      _
    $region47: #{tpu_custom_call.1} parent=1 // pred_check_branch
      %698 = sbr.rel (0) target = $region49
    $region48: #{tpu_custom_call.1} parent=1 // pred_region
      _
    $region49: #{tpu_custom_call.1} parent=1 // pred_fallthru
      _
    %699 = vsyncpa [#allocation4], 1
    %700 = vsyncpa [#allocation6], 1

</llo_original>
